<compile_context>
chip_gen: v7x
topology: tpu7x:2x2x1
jax: 0.10.0
libtpu: 0.0.40
codegen_flags: <defaults>
</compile_context>

<pallas_src>
import functools

import jax
import jax.numpy as jnp
import numpy as np
from jax.experimental import pallas as pl
from jax.experimental.pallas import tpu as pltpu

# ----------------------------- model constants ------------------------------
X_MULTIRES = 10                       # x_multiers
T_MULTIRES = 10                       # t_multiers
IN_CH_X = 3 * (1 + 2 * X_MULTIRES)    # 63
IN_CH_T = 1 * (1 + 2 * T_MULTIRES)    # 21
FEAT = IN_CH_X + IN_CH_T              # 84
HID = 64
OUT = 9                               # 6 ortho6d + 3 translation
NANG = 3 * X_MULTIRES                 # 30 frequency-scaled angles
N_CAMS = 4

# Tile cap: sweep 1024-2048.  v5e note: past ~2048 set
# pltpu.CompilerParams(vmem_limit_bytes=...) explicitly (16 MiB default
# scoped VMEM); at <= 2048 all generations fit comfortably.
TM_CAP = 2048

_HIGH = jax.lax.Precision.HIGHEST     # wrapper / reference f32 precision
_PRECISIONS = {
    "default": jax.lax.Precision.DEFAULT,   # single-pass bf16 MXU (production)
    "high": jax.lax.Precision.HIGH,
    "highest": jax.lax.Precision.HIGHEST,   # full-f32 passes (validation)
}


def _round_up(x, m):
    return (x + m - 1) // m * m


def _gelu_exact(x):
    # PyTorch nn.GELU() default = exact erf formulation.
    return 0.5 * x * (1.0 + jax.lax.erf(x * 0.7071067811865476))


def _cross_rows(a, b):
    a0, a1, a2 = a[:, 0:1], a[:, 1:2], a[:, 2:3]
    b0, b1, b2 = b[:, 0:1], b[:, 1:2], b[:, 2:3]
    return jnp.concatenate(
        [a1 * b2 - a2 * b1, a2 * b0 - a0 * b2, a0 * b1 - a1 * b0], axis=-1)


def _normalize_rows(v, eps=1e-12):
    # F.normalize(p=2, dim=-1): v / max(||v||, eps)
    # == v * rsqrt(max(||v||^2, eps^2)); rsqrt runs on the EUP slot.
    n2 = jnp.sum(v * v, axis=-1, keepdims=True)
    return v * jax.lax.rsqrt(jnp.maximum(n2, eps * eps))


# --------------------------------- kernel -----------------------------------
def pixelpose_kernel(pts_ref, freq_ref, w1_ref, b1_ref, w2_ref, b2_ref,
                     w3_ref, b3_ref, kmat_ref, out_ref, *, precision):
    pts = pts_ref[...]                                            # (TM, 3)

    # Vectorized NeRF positional encoding of xyz (VPU, exact):
    #   angles[:, 3k+i] = pts[:, i] * 2**k
    pts_rep = jnp.concatenate([pts] * X_MULTIRES, axis=-1)        # (TM, 30)
    angles = pts_rep * freq_ref[...]                              # exact scale
    sin_a = jnp.sin(angles)
    cos_a = jnp.cos(angles)

    # lin1: W1 rows were regrouped in the wrapper as [identity | sin | cos];
    # the constant time encoding is folded into b1_eff -> one merged matmul.
    feats = jnp.concatenate([pts, sin_a, cos_a], axis=-1)         # (TM, 63)
    h = jnp.dot(feats, w1_ref[...], precision=precision,
                preferred_element_type=jnp.float32) + b1_ref[...]
    h = _gelu_exact(h)
    h = _gelu_exact(jnp.dot(h, w2_ref[...], precision=precision,
                            preferred_element_type=jnp.float32) + b2_ref[...])
    pred = jnp.dot(h, w3_ref[...], precision=precision,
                   preferred_element_type=jnp.float32) + b3_ref[...]  # (TM, 9)

    # get_rotation_matrix_from_ortho6d
    x_raw, y_raw, tvec = pred[:, 0:3], pred[:, 3:6], pred[:, 6:9]
    x = _normalize_rows(x_raw)
    z = _normalize_rows(_cross_rows(x, y_raw))
    y = _cross_rows(z, x)

    # c2w = [R | t]; c2w @ init expressed as one (TM,12)@(12,12) matmul where
    # kmat[g*3+i, i'*4+j] = init[g, j] * delta(i, i'); one full-block store.
    lmat = jnp.concatenate([x, y, z, tvec], axis=-1)              # (TM, 12)
    out_ref[...] = jnp.dot(lmat, kmat_ref[...], precision=precision,
                           preferred_element_type=jnp.float32)


# -------------------------- static index/constant tables ---------------------
# freq_row[3k+i] = 2**k   (angles = lane-tiled pts * freq_row)
_FREQ_ROW = np.zeros((1, NANG), np.float32)
for _k in range(X_MULTIRES):
    _FREQ_ROW[0, 3 * _k: 3 * _k + 3] = 2.0 ** _k

# W1 rows for sin/cos features in d-nerf order:
#   feats_x = [x, sin(2^0 x), cos(2^0 x), ..., sin(2^9 x), cos(2^9 x)]
_SIN_ROWS = np.concatenate([3 + 6 * k + np.arange(3) for k in range(X_MULTIRES)])
_COS_ROWS = _SIN_ROWS + 3


# -------------------------------- wrapper ------------------------------------
@functools.partial(jax.jit, static_argnames=("precision",))
def pixel_pose_forward(input_pts, cam_id, params, init_c2w, precision="default"):
    """input_pts: (B, 3) or (B, N, 3) f32; cam_id: traced int32 scalar."""
    squeeze = input_pts.ndim == 2
    if squeeze:
        input_pts = input_pts[:, None, :]
    B, N, _ = input_pts.shape
    M = B * N
    w1, b1, w2, b2, w3, b3 = params
    prec = _PRECISIONS[precision]

    # Tile size: big enough to swamp the ~0.35 us/step pipeline overhead, but
    # keep >= 2 grid steps when M allows so v7x's two TensorCores both get
    # work on the "parallel" axis.  Sweep TM_CAP in 1024-2048.
    TM = min(TM_CAP, _round_up(pl.cdiv(M, 2), 8))
    M_pad = _round_up(M, TM)

    pts = input_pts.reshape(M, 3).astype(jnp.float32)
    pts = jnp.pad(pts, ((0, M_pad - M), (0, 0)))

    # -------- per-call (traced, O(1)) constants hoisted out of the kernel ---
    t = cam_id.astype(jnp.float32)
    t_feats = [t[None]]
    for k in range(T_MULTIRES):
        f = jnp.float32(2.0 ** k)
        t_feats.append(jnp.sin(t * f)[None])
        t_feats.append(jnp.cos(t * f)[None])
    t_feats = jnp.concatenate(t_feats)                            # (21,)
    # Fold the constant time encoding into the first-layer bias.
    b1_eff = b1 + jnp.dot(t_feats[None, :], w1[IN_CH_X:, :],
                          precision=_HIGH,
                          preferred_element_type=jnp.float32)     # (1, HID)

    # Merge the first layer into one (63, 64) block ordered [identity|sin|cos]
    # to match the in-kernel feats = [pts, sin, cos] concat.
    w1x = w1[:IN_CH_X, :]
    w1m = jnp.concatenate(
        [w1x[0:3, :], w1x[_SIN_ROWS, :], w1x[_COS_ROWS, :]], axis=0)  # (63, 64)

    init = init_c2w[cam_id]                                       # (4, 4)
    kmat = (init[:, None, None, :] *
            jnp.eye(3, dtype=jnp.float32)[None, :, :, None]).reshape(12, 12)
    freq_row = jnp.asarray(_FREQ_ROW)

    kernel = functools.partial(pixelpose_kernel, precision=prec)

    out = pl.pallas_call(
        kernel,
        out_shape=jax.ShapeDtypeStruct((M_pad, 12), jnp.float32),
        grid_spec=pltpu.PrefetchScalarGridSpec(
            num_scalar_prefetch=0,
            grid=(M_pad // TM,),
            in_specs=[
                pl.BlockSpec((TM, 3), lambda i: (i, 0)),          # points tile
                pl.BlockSpec((1, NANG), lambda i: (0, 0)),        # 2^k row
                pl.BlockSpec((IN_CH_X, HID), lambda i: (0, 0)),   # merged W1
                pl.BlockSpec((1, HID), lambda i: (0, 0)),         # b1_eff
                pl.BlockSpec((HID, HID), lambda i: (0, 0)),       # W2
                pl.BlockSpec((1, HID), lambda i: (0, 0)),         # b2
                pl.BlockSpec((HID, OUT), lambda i: (0, 0)),       # W3
                pl.BlockSpec((1, OUT), lambda i: (0, 0)),         # b3
                pl.BlockSpec((12, 12), lambda i: (0, 0)),         # init fold matrix
            ],
            out_specs=pl.BlockSpec((TM, 12), lambda i: (i, 0)),
        ),
        compiler_params=pltpu.CompilerParams(
            dimension_semantics=("parallel",)),
    )(pts, freq_row, w1m, b1_eff, w2, b2, w3, b3, kmat)

    out = out[:M].reshape(B, N, 3, 4)
    if squeeze:
        out = out[:, 0]
    return out


# ------------------------- pure-JAX reference (check) ------------------------
def pixel_pose_ref(input_pts, cam_id, params, init_c2w):
    B, N, _ = input_pts.shape
    pts = input_pts.reshape(-1, 3)
    t = jnp.broadcast_to(cam_id.astype(jnp.float32), (pts.shape[0], 1))

    def embed(v, L):
        outs = [v]
        for k in range(L):
            f = 2.0 ** k
            outs.append(jnp.sin(v * f))
            outs.append(jnp.cos(v * f))
        return jnp.concatenate(outs, axis=-1)

    feats = jnp.concatenate([embed(pts, X_MULTIRES), embed(t, T_MULTIRES)], -1)
    w1, b1, w2, b2, w3, b3 = params
    h = _gelu_exact(jnp.dot(feats, w1, precision=_HIGH) + b1)
    h = _gelu_exact(jnp.dot(h, w2, precision=_HIGH) + b2)
    pred = jnp.dot(h, w3, precision=_HIGH) + b3
    x_raw, y_raw, tv = pred[:, :3], pred[:, 3:6], pred[:, 6:9]

    def norm(v):
        return v / jnp.maximum(jnp.linalg.norm(v, axis=-1, keepdims=True), 1e-12)

    x = norm(x_raw)
    z = norm(jnp.cross(x, y_raw))
    y = jnp.cross(z, x)
    r = jnp.stack([x, y, z], axis=-1)                             # (M, 3, 3)
    c2w = jnp.concatenate([r, tv[:, :, None]], axis=-1)           # (M, 3, 4)
    c2w = jnp.matmul(c2w, init_c2w[cam_id], precision=_HIGH)
    return c2w.reshape(B, N, 3, 4)


# --------------------------------- params ------------------------------------
def linear_params(key, fan_in, fan_out):
    # PyTorch nn.Linear default init: U(-1/sqrt(fan_in), 1/sqrt(fan_in))
    kw, kb = jax.random.split(key)
    bound = 1.0 / np.sqrt(fan_in)
    w = jax.random.uniform(kw, (fan_in, fan_out), jnp.float32, -bound, bound)
    b = jax.random.uniform(kb, (1, fan_out), jnp.float32, -bound, bound)
    return w, b


if __name__ == "__main__":
    key = jax.random.PRNGKey(0)
    k_pts, k1, k2, k3, kc = jax.random.split(key, 5)

    B, N = 2, 8                                  # input_pts: (B, N, 3)
    input_pts = jax.random.normal(k_pts, (B, N, 3), jnp.float32)

    w1, b1 = linear_params(k1, FEAT, HID)
    w2, b2 = linear_params(k2, HID, HID)
    w3, b3 = linear_params(k3, HID, OUT)         # rot_type='ord' -> not zeroed
    params = (w1, b1, w2, b2, w3, b3)

    # init_c2w: (N_CAMS, 4, 4), identity + small perturbation on top 3x4 rows.
    base = jnp.tile(jnp.eye(4, dtype=jnp.float32)[None], (N_CAMS, 1, 1))
    init_c2w = base.at[:, :3, :].add(
        0.1 * jax.random.normal(kc, (N_CAMS, 3, 4), jnp.float32))

    cam_id = jnp.int32(2)                        # traced (no recompile per cam)
    ref = pixel_pose_ref(input_pts, cam_id, params, init_c2w)

    # 1) Tight structural check: full-f32 matmul passes vs. the f32 reference.
    out_hi = pixel_pose_forward(input_pts, cam_id, params, init_c2w,
                                precision="highest")
    out_hi = jax.block_until_ready(out_hi)
    assert out_hi.shape == (B, N, 3, 4)
    np.testing.assert_allclose(np.asarray(out_hi), np.asarray(ref),
                               rtol=1e-3, atol=1e-3)

    # 2) Production (perf) config: single-pass bf16 MXU matmuls.  The
    #    normalize/cross epilogue can amplify the ~1e-3 relative bf16 matmul
    #    error on near-degenerate rows, so only a loose sanity bound is
    #    asserted here (typical deviation is a few 1e-3).
    out_fast = pixel_pose_forward(input_pts, cam_id, params, init_c2w)
    out_fast = jax.block_until_ready(out_fast)
    fast_np = np.asarray(out_fast)
    assert fast_np.shape == (B, N, 3, 4)
    assert np.all(np.isfinite(fast_np))
    max_err = float(np.max(np.abs(fast_np - np.asarray(ref))))
    assert max_err < 0.5, f"bf16-precision path deviates too much: {max_err}"

    print("KERNEL_OK")
</pallas_src>

<mosaic_0001>
module attributes {stable_mosaic.version = 11 : i64} {
  func.func @pixelpose_kernel(%arg0: i32, %arg1: memref<8x3xf32, #tpu.memory_space<vmem>>, %arg2: memref<1x30xf32, #tpu.memory_space<vmem>>, %arg3: memref<63x64xf32, #tpu.memory_space<vmem>>, %arg4: memref<1x64xf32, #tpu.memory_space<vmem>>, %arg5: memref<64x64xf32, #tpu.memory_space<vmem>>, %arg6: memref<1x64xf32, #tpu.memory_space<vmem>>, %arg7: memref<64x9xf32, #tpu.memory_space<vmem>>, %arg8: memref<1x9xf32, #tpu.memory_space<vmem>>, %arg9: memref<12x12xf32, #tpu.memory_space<vmem>>, %arg10: memref<8x12xf32, #tpu.memory_space<vmem>>) attributes {dimension_semantics = [#tpu.dimension_semantics<parallel>], iteration_bounds = array<i64: 2>, scalar_prefetch = 0 : i64, scratch_operands = 0 : i64, tpu.core_type = #tpu.core_type<tc>, window_params = [{transform_indices = @transform_0, window_bounds = array<i64: 8, 3>}, {pipeline_mode = #tpu.pipeline_mode<synchronous>, transform_indices = @transform_1, window_bounds = array<i64: 1, 30>}, {pipeline_mode = #tpu.pipeline_mode<synchronous>, transform_indices = @transform_2, window_bounds = array<i64: 63, 64>}, {pipeline_mode = #tpu.pipeline_mode<synchronous>, transform_indices = @transform_3, window_bounds = array<i64: 1, 64>}, {pipeline_mode = #tpu.pipeline_mode<synchronous>, transform_indices = @transform_4, window_bounds = array<i64: 64, 64>}, {pipeline_mode = #tpu.pipeline_mode<synchronous>, transform_indices = @transform_5, window_bounds = array<i64: 1, 64>}, {pipeline_mode = #tpu.pipeline_mode<synchronous>, transform_indices = @transform_6, window_bounds = array<i64: 64, 9>}, {pipeline_mode = #tpu.pipeline_mode<synchronous>, transform_indices = @transform_7, window_bounds = array<i64: 1, 9>}, {pipeline_mode = #tpu.pipeline_mode<synchronous>, transform_indices = @transform_8, window_bounds = array<i64: 12, 12>}, {transform_indices = @transform_9, window_bounds = array<i64: 8, 12>}]} {
    %c0 = arith.constant 0 : index
    %c0_0 = arith.constant 0 : index
    %0 = vector.load %arg1[%c0, %c0_0] : memref<8x3xf32, #tpu.memory_space<vmem>>, vector<8x3xf32>
    %1 = tpu.concatenate %0, %0, %0, %0, %0, %0, %0, %0, %0, %0 in 1 : vector<8x3xf32>, vector<8x3xf32>, vector<8x3xf32>, vector<8x3xf32>, vector<8x3xf32>, vector<8x3xf32>, vector<8x3xf32>, vector<8x3xf32>, vector<8x3xf32>, vector<8x3xf32> -> vector<8x30xf32>
    %c0_1 = arith.constant 0 : index
    %c0_2 = arith.constant 0 : index
    %2 = vector.load %arg2[%c0_1, %c0_2] : memref<1x30xf32, #tpu.memory_space<vmem>>, vector<1x30xf32>
    %3 = vector.broadcast %2 : vector<1x30xf32> to vector<8x30xf32>
    %4 = arith.mulf %1, %3 : vector<8x30xf32>
    %5 = math.sin %4 : vector<8x30xf32>
    %6 = math.cos %4 : vector<8x30xf32>
    %7 = tpu.concatenate %0, %5, %6 in 1 : vector<8x3xf32>, vector<8x30xf32>, vector<8x30xf32> -> vector<8x63xf32>
    %c0_3 = arith.constant 0 : index
    %c0_4 = arith.constant 0 : index
    %8 = vector.load %arg3[%c0_3, %c0_4] : memref<63x64xf32, #tpu.memory_space<vmem>>, vector<63x64xf32>
    %cst = arith.constant dense<0.000000e+00> : vector<8x64xf32>
    %9 = tpu.matmul %7, %8, %cst {dimension_numbers = #tpu.dot_dimension_numbers<[1], [0], [0], [1], [0, 0, 1, 1], [], []>, precision = #tpu.contract_precision<fp32>} : vector<8x63xf32>, vector<63x64xf32>, vector<8x64xf32> -> vector<8x64xf32>
    %c0_5 = arith.constant 0 : index
    %c0_6 = arith.constant 0 : index
    %10 = vector.load %arg4[%c0_5, %c0_6] : memref<1x64xf32, #tpu.memory_space<vmem>>, vector<1x64xf32>
    %11 = vector.broadcast %10 : vector<1x64xf32> to vector<8x64xf32>
    %12 = arith.addf %9, %11 : vector<8x64xf32>
    %cst_7 = arith.constant 5.000000e-01 : f32
    %13 = vector.broadcast %cst_7 : f32 to vector<8x64xf32>
    %14 = arith.mulf %13, %12 : vector<8x64xf32>
    %cst_8 = arith.constant 0.707106769 : f32
    %15 = vector.broadcast %cst_8 : f32 to vector<8x64xf32>
    %16 = arith.mulf %12, %15 : vector<8x64xf32>
    %17 = math.erf %16 : vector<8x64xf32>
    %cst_9 = arith.constant 1.000000e+00 : f32
    %18 = vector.broadcast %cst_9 : f32 to vector<8x64xf32>
    %19 = arith.addf %18, %17 : vector<8x64xf32>
    %20 = arith.mulf %14, %19 : vector<8x64xf32>
    %c0_10 = arith.constant 0 : index
    %c0_11 = arith.constant 0 : index
    %21 = vector.load %arg5[%c0_10, %c0_11] : memref<64x64xf32, #tpu.memory_space<vmem>>, vector<64x64xf32>
    %cst_12 = arith.constant dense<0.000000e+00> : vector<8x64xf32>
    %22 = tpu.matmul %20, %21, %cst_12 {dimension_numbers = #tpu.dot_dimension_numbers<[1], [0], [0], [1], [0, 0, 1, 1], [], []>, precision = #tpu.contract_precision<fp32>} : vector<8x64xf32>, vector<64x64xf32>, vector<8x64xf32> -> vector<8x64xf32>
    %c0_13 = arith.constant 0 : index
    %c0_14 = arith.constant 0 : index
    %23 = vector.load %arg6[%c0_13, %c0_14] : memref<1x64xf32, #tpu.memory_space<vmem>>, vector<1x64xf32>
    %24 = vector.broadcast %23 : vector<1x64xf32> to vector<8x64xf32>
    %25 = arith.addf %22, %24 : vector<8x64xf32>
    %cst_15 = arith.constant 5.000000e-01 : f32
    %26 = vector.broadcast %cst_15 : f32 to vector<8x64xf32>
    %27 = arith.mulf %26, %25 : vector<8x64xf32>
    %cst_16 = arith.constant 0.707106769 : f32
    %28 = vector.broadcast %cst_16 : f32 to vector<8x64xf32>
    %29 = arith.mulf %25, %28 : vector<8x64xf32>
    %30 = math.erf %29 : vector<8x64xf32>
    %cst_17 = arith.constant 1.000000e+00 : f32
    %31 = vector.broadcast %cst_17 : f32 to vector<8x64xf32>
    %32 = arith.addf %31, %30 : vector<8x64xf32>
    %33 = arith.mulf %27, %32 : vector<8x64xf32>
    %c0_18 = arith.constant 0 : index
    %c0_19 = arith.constant 0 : index
    %34 = vector.load %arg7[%c0_18, %c0_19] : memref<64x9xf32, #tpu.memory_space<vmem>>, vector<64x9xf32>
    %cst_20 = arith.constant dense<0.000000e+00> : vector<8x9xf32>
    %35 = tpu.matmul %33, %34, %cst_20 {dimension_numbers = #tpu.dot_dimension_numbers<[1], [0], [0], [1], [0, 0, 1, 1], [], []>, precision = #tpu.contract_precision<fp32>} : vector<8x64xf32>, vector<64x9xf32>, vector<8x9xf32> -> vector<8x9xf32>
    %c0_21 = arith.constant 0 : index
    %c0_22 = arith.constant 0 : index
    %36 = vector.load %arg8[%c0_21, %c0_22] : memref<1x9xf32, #tpu.memory_space<vmem>>, vector<1x9xf32>
    %37 = vector.broadcast %36 : vector<1x9xf32> to vector<8x9xf32>
    %38 = arith.addf %35, %37 : vector<8x9xf32>
    %39 = vector.extract_strided_slice %38 {offsets = [0, 0], sizes = [8, 3], strides = [1, 1]} : vector<8x9xf32> to vector<8x3xf32>
    %40 = vector.extract_strided_slice %38 {offsets = [0, 3], sizes = [8, 3], strides = [1, 1]} : vector<8x9xf32> to vector<8x3xf32>
    %41 = vector.extract_strided_slice %38 {offsets = [0, 6], sizes = [8, 3], strides = [1, 1]} : vector<8x9xf32> to vector<8x3xf32>
    %42 = arith.mulf %39, %39 : vector<8x3xf32>
    %cst_23 = arith.constant dense<0.000000e+00> : vector<8xf32>
    %43 = vector.multi_reduction <add>, %42, %cst_23 [1] : vector<8x3xf32> to vector<8xf32>
    %44 = vector.shape_cast %43 : vector<8xf32> to vector<8x1xf32>
    %cst_24 = arith.constant 1.000000e-24 : f32
    %45 = vector.broadcast %cst_24 : f32 to vector<8x1xf32>
    %46 = arith.maximumf %44, %45 : vector<8x1xf32>
    %47 = math.rsqrt %46 : vector<8x1xf32>
    %48 = vector.broadcast %47 : vector<8x1xf32> to vector<8x3xf32>
    %49 = arith.mulf %39, %48 : vector<8x3xf32>
    %50 = vector.extract_strided_slice %49 {offsets = [0, 0], sizes = [8, 1], strides = [1, 1]} : vector<8x3xf32> to vector<8x1xf32>
    %51 = vector.extract_strided_slice %49 {offsets = [0, 1], sizes = [8, 1], strides = [1, 1]} : vector<8x3xf32> to vector<8x1xf32>
    %52 = vector.extract_strided_slice %49 {offsets = [0, 2], sizes = [8, 1], strides = [1, 1]} : vector<8x3xf32> to vector<8x1xf32>
    %53 = vector.extract_strided_slice %40 {offsets = [0, 0], sizes = [8, 1], strides = [1, 1]} : vector<8x3xf32> to vector<8x1xf32>
    %54 = vector.extract_strided_slice %40 {offsets = [0, 1], sizes = [8, 1], strides = [1, 1]} : vector<8x3xf32> to vector<8x1xf32>
    %55 = vector.extract_strided_slice %40 {offsets = [0, 2], sizes = [8, 1], strides = [1, 1]} : vector<8x3xf32> to vector<8x1xf32>
    %56 = arith.mulf %51, %55 : vector<8x1xf32>
    %57 = arith.mulf %52, %54 : vector<8x1xf32>
    %58 = arith.subf %56, %57 : vector<8x1xf32>
    %59 = arith.mulf %52, %53 : vector<8x1xf32>
    %60 = arith.mulf %50, %55 : vector<8x1xf32>
    %61 = arith.subf %59, %60 : vector<8x1xf32>
    %62 = arith.mulf %50, %54 : vector<8x1xf32>
    %63 = arith.mulf %51, %53 : vector<8x1xf32>
    %64 = arith.subf %62, %63 : vector<8x1xf32>
    %65 = tpu.concatenate %58, %61, %64 in 1 : vector<8x1xf32>, vector<8x1xf32>, vector<8x1xf32> -> vector<8x3xf32>
    %66 = arith.mulf %65, %65 : vector<8x3xf32>
    %cst_25 = arith.constant dense<0.000000e+00> : vector<8xf32>
    %67 = vector.multi_reduction <add>, %66, %cst_25 [1] : vector<8x3xf32> to vector<8xf32>
    %68 = vector.shape_cast %67 : vector<8xf32> to vector<8x1xf32>
    %cst_26 = arith.constant 1.000000e-24 : f32
    %69 = vector.broadcast %cst_26 : f32 to vector<8x1xf32>
    %70 = arith.maximumf %68, %69 : vector<8x1xf32>
    %71 = math.rsqrt %70 : vector<8x1xf32>
    %72 = vector.broadcast %71 : vector<8x1xf32> to vector<8x3xf32>
    %73 = arith.mulf %65, %72 : vector<8x3xf32>
    %74 = vector.extract_strided_slice %73 {offsets = [0, 0], sizes = [8, 1], strides = [1, 1]} : vector<8x3xf32> to vector<8x1xf32>
    %75 = vector.extract_strided_slice %73 {offsets = [0, 1], sizes = [8, 1], strides = [1, 1]} : vector<8x3xf32> to vector<8x1xf32>
    %76 = vector.extract_strided_slice %73 {offsets = [0, 2], sizes = [8, 1], strides = [1, 1]} : vector<8x3xf32> to vector<8x1xf32>
    %77 = vector.extract_strided_slice %49 {offsets = [0, 0], sizes = [8, 1], strides = [1, 1]} : vector<8x3xf32> to vector<8x1xf32>
    %78 = vector.extract_strided_slice %49 {offsets = [0, 1], sizes = [8, 1], strides = [1, 1]} : vector<8x3xf32> to vector<8x1xf32>
    %79 = vector.extract_strided_slice %49 {offsets = [0, 2], sizes = [8, 1], strides = [1, 1]} : vector<8x3xf32> to vector<8x1xf32>
    %80 = arith.mulf %75, %79 : vector<8x1xf32>
    %81 = arith.mulf %76, %78 : vector<8x1xf32>
    %82 = arith.subf %80, %81 : vector<8x1xf32>
    %83 = arith.mulf %76, %77 : vector<8x1xf32>
    %84 = arith.mulf %74, %79 : vector<8x1xf32>
    %85 = arith.subf %83, %84 : vector<8x1xf32>
    %86 = arith.mulf %74, %78 : vector<8x1xf32>
    %87 = arith.mulf %75, %77 : vector<8x1xf32>
    %88 = arith.subf %86, %87 : vector<8x1xf32>
    %89 = tpu.concatenate %82, %85, %88 in 1 : vector<8x1xf32>, vector<8x1xf32>, vector<8x1xf32> -> vector<8x3xf32>
    %90 = tpu.concatenate %49, %89, %73, %41 in 1 : vector<8x3xf32>, vector<8x3xf32>, vector<8x3xf32>, vector<8x3xf32> -> vector<8x12xf32>
    %c0_27 = arith.constant 0 : index
    %c0_28 = arith.constant 0 : index
    %91 = vector.load %arg9[%c0_27, %c0_28] : memref<12x12xf32, #tpu.memory_space<vmem>>, vector<12x12xf32>
    %cst_29 = arith.constant dense<0.000000e+00> : vector<8x12xf32>
    %92 = tpu.matmul %90, %91, %cst_29 {dimension_numbers = #tpu.dot_dimension_numbers<[1], [0], [0], [1], [0, 0, 1, 1], [], []>, precision = #tpu.contract_precision<fp32>} : vector<8x12xf32>, vector<12x12xf32>, vector<8x12xf32> -> vector<8x12xf32>
    %c0_30 = arith.constant 0 : index
    %c0_31 = arith.constant 0 : index
    %93 = vector.load %arg10[%c0_30, %c0_31] : memref<8x12xf32, #tpu.memory_space<vmem>>, vector<8x12xf32>
    tpu.vector_store %arg10[%c0_30, %c0_31], %92 {strides = array<i32>} : memref<8x12xf32, #tpu.memory_space<vmem>>, vector<8x12xf32>,
    return
  }
  func.func @transform_0(%arg0: i32) -> (i32, i32) {
    %c0_i32 = arith.constant 0 : i32
    %c0_i32_0 = arith.constant 0 : i32
    return %arg0, %c0_i32 : i32, i32
  }
  func.func @transform_1(%arg0: i32) -> (i32, i32) {
    %c0_i32 = arith.constant 0 : i32
    %c0_i32_0 = arith.constant 0 : i32
    %c0_i32_1 = arith.constant 0 : i32
    return %c0_i32, %c0_i32_0 : i32, i32
  }
  func.func @transform_2(%arg0: i32) -> (i32, i32) {
    %c0_i32 = arith.constant 0 : i32
    %c0_i32_0 = arith.constant 0 : i32
    %c0_i32_1 = arith.constant 0 : i32
    return %c0_i32, %c0_i32_0 : i32, i32
  }
  func.func @transform_3(%arg0: i32) -> (i32, i32) {
    %c0_i32 = arith.constant 0 : i32
    %c0_i32_0 = arith.constant 0 : i32
    %c0_i32_1 = arith.constant 0 : i32
    return %c0_i32, %c0_i32_0 : i32, i32
  }
  func.func @transform_4(%arg0: i32) -> (i32, i32) {
    %c0_i32 = arith.constant 0 : i32
    %c0_i32_0 = arith.constant 0 : i32
    %c0_i32_1 = arith.constant 0 : i32
    return %c0_i32, %c0_i32_0 : i32, i32
  }
  func.func @transform_5(%arg0: i32) -> (i32, i32) {
    %c0_i32 = arith.constant 0 : i32
    %c0_i32_0 = arith.constant 0 : i32
    %c0_i32_1 = arith.constant 0 : i32
    return %c0_i32, %c0_i32_0 : i32, i32
  }
  func.func @transform_6(%arg0: i32) -> (i32, i32) {
    %c0_i32 = arith.constant 0 : i32
    %c0_i32_0 = arith.constant 0 : i32
    %c0_i32_1 = arith.constant 0 : i32
    return %c0_i32, %c0_i32_0 : i32, i32
  }
  func.func @transform_7(%arg0: i32) -> (i32, i32) {
    %c0_i32 = arith.constant 0 : i32
    %c0_i32_0 = arith.constant 0 : i32
    %c0_i32_1 = arith.constant 0 : i32
    return %c0_i32, %c0_i32_0 : i32, i32
  }
  func.func @transform_8(%arg0: i32) -> (i32, i32) {
    %c0_i32 = arith.constant 0 : i32
    %c0_i32_0 = arith.constant 0 : i32
    %c0_i32_1 = arith.constant 0 : i32
    return %c0_i32, %c0_i32_0 : i32, i32
  }
  func.func @transform_9(%arg0: i32) -> (i32, i32) {
    %c0_i32 = arith.constant 0 : i32
    %c0_i32_0 = arith.constant 0 : i32
    return %arg0, %c0_i32 : i32, i32
  }
}

</mosaic_0001>

<llo_original>
// kernel: pixel_pose_forward.1
$region0: #{pixel_pose_forward.1}
  #allocation0 [shape = 'u32[]', space=smem, size = 0x4, offset = 0x4, fixed_abs, tag = 'smem constant byte address 0x4 - core index']
  #allocation1 [shape = 'u32[144,128]{1,0:T(1,128)}', space=vmem, size = 0x12000, scoped, tag = 'internal scratch']
  %s0 = inlined_call_operand.vmem [shape: f32[16,3], index: 0, kind: input, shape index: {}]
  %s1 = inlined_call_operand.vmem [shape: f32[1,30], index: 1, kind: input, shape index: {}]
  %s2 = inlined_call_operand.vmem [shape: f32[63,64], index: 2, kind: input, shape index: {}]
  %s3 = inlined_call_operand.vmem [shape: f32[1,64], index: 3, kind: input, shape index: {}]
  %s4 = inlined_call_operand.vmem [shape: f32[64,64], index: 4, kind: input, shape index: {}]
  %s5 = inlined_call_operand.vmem [shape: f32[1,64], index: 5, kind: input, shape index: {}]
  %s6 = inlined_call_operand.vmem [shape: f32[64,9], index: 6, kind: input, shape index: {}]
  %s7 = inlined_call_operand.vmem [shape: f32[1,9], index: 7, kind: input, shape index: {}]
  %s8 = inlined_call_operand.vmem [shape: f32[12,12], index: 8, kind: input, shape index: {}]
  %s9 = inlined_call_operand.vmem [shape: f32[16,12], index: 9, kind: output, shape index: {}]
  %s10 = sld [smem:[#allocation0]]
  $region69: #{pixel_pose_forward.1} parent=0
    _
  %s12 = ssub.s32 1, %s10
  %s13 = scalar_select 0, %s12, %s10
  loop: start=0, step=1, limit=4
  $region2: #{pixel_pose_forward.1} parent=0 // loop_pre_header
    _
  $region3: #{pixel_pose_forward.1} parent=0 // loop_header
    %s15 = sphi 0, %s19
    %p16 = scmp.ge.s32.totalorder %s15, 4
    %s25 = sphi 0, %s27
    %s28 = sphi 0, %s25
    %s29 = sphi 0, %s28
    %s45 = sphi 0, %s29
    %s49 = sphi 0, %s49
    %s51 = sphi 0, %s49
    %s52 = sphi 0, %s51
    %s66 = sphi 0, %s52
    %s70 = sphi 0, %s70
    %s72 = sphi 0, %s70
    %s73 = sphi 0, %s72
    %s87 = sphi 0, %s73
    %s91 = sphi 0, %s91
    %s93 = sphi 0, %s91
    %s94 = sphi 0, %s93
    %s108 = sphi 0, %s94
    %s112 = sphi 0, %s112
    %s114 = sphi 0, %s112
    %s115 = sphi 0, %s114
    %s129 = sphi 0, %s115
    %s133 = sphi 0, %s133
    %s135 = sphi 0, %s133
    %s136 = sphi 0, %s135
    %s150 = sphi 0, %s136
    %s154 = sphi 0, %s154
    %s156 = sphi 0, %s154
    %s157 = sphi 0, %s156
    %s171 = sphi 0, %s157
    %s175 = sphi 0, %s175
    %s177 = sphi 0, %s175
    %s178 = sphi 0, %s177
    %s192 = sphi 0, %s178
    %s196 = sphi 0, %s196
    %s198 = sphi 0, %s196
    %s199 = sphi 0, %s198
    %s213 = sphi 0, %s199
    %s219 = sphi 0, %s221
    %s222 = sphi 0, %s219
    %s223 = sphi 0, %s222
    %s239 = sphi 0, %s223
  $region4: #{pixel_pose_forward.1} parent=0 // loop_header_branch
    %18 = sbr.rel (%p16) target = $region8
  $region5: #{pixel_pose_forward.1} parent=0 // loop_body
    %s20 = ssub.s32 %s15, 1
    %s21 = ssub.s32 %s15, 2
    %s22 = sadd.s32 %s15, 1
    %s23 = ssub.s32 %s15, %s22
    %p24 = scmp.eq.s32.totalorder %s23, 0
    %s26 = sadd.s32 %s25, 1
    %s27 = scalar_select %p24, %s25, %s26
    %p30 = pneg %p24
    %p31 = scmp.eq.s32.totalorder %s15, 1
    %p32 = por %p30, %p31
    %p33 = scmp.ne.s32.totalorder %s25, %s28
    %p34 = scmp.eq.s32.totalorder %s15, 0
    %p35 = por %p33, %p34
    %p36 = scmp.ne.s32.totalorder %s25, %s28
    %p37 = scmp.eq.s32.totalorder %s20, 1
    %p38 = por %p36, %p37
    %p39 = scmp.ne.s32.totalorder %s28, %s29
    %p40 = scmp.eq.s32.totalorder %s20, 0
    %p41 = por %p39, %p40
    %p42 = scmp.ne.s32.totalorder %s28, %s29
    %p43 = scmp.eq.s32.totalorder %s21, 1
    %p44 = por %p42, %p43
    %p46 = scmp.ne.s32.totalorder %s29, %s45
    %p47 = scmp.eq.s32.totalorder %s21, 0
    %p48 = por %p46, %p47
    %s50 = sadd.s32 %s49, 1
    %p53 = scmp.eq.s32.totalorder %s15, 1
    %p54 = scmp.ne.s32.totalorder %s49, %s51
    %p55 = scmp.eq.s32.totalorder %s15, 0
    %p56 = por %p54, %p55
    %p57 = scmp.ne.s32.totalorder %s49, %s51
    %p58 = scmp.eq.s32.totalorder %s20, 1
    %p59 = por %p57, %p58
    %p60 = scmp.ne.s32.totalorder %s51, %s52
    %p61 = scmp.eq.s32.totalorder %s20, 0
    %p62 = por %p60, %p61
    %p63 = scmp.ne.s32.totalorder %s51, %s52
    %p64 = scmp.eq.s32.totalorder %s21, 1
    %p65 = por %p63, %p64
    %p67 = scmp.ne.s32.totalorder %s52, %s66
    %p68 = scmp.eq.s32.totalorder %s21, 0
    %p69 = por %p67, %p68
    %s71 = sadd.s32 %s70, 1
    %p74 = scmp.eq.s32.totalorder %s15, 1
    %p75 = scmp.ne.s32.totalorder %s70, %s72
    %p76 = scmp.eq.s32.totalorder %s15, 0
    %p77 = por %p75, %p76
    %p78 = scmp.ne.s32.totalorder %s70, %s72
    %p79 = scmp.eq.s32.totalorder %s20, 1
    %p80 = por %p78, %p79
    %p81 = scmp.ne.s32.totalorder %s72, %s73
    %p82 = scmp.eq.s32.totalorder %s20, 0
    %p83 = por %p81, %p82
    %p84 = scmp.ne.s32.totalorder %s72, %s73
    %p85 = scmp.eq.s32.totalorder %s21, 1
    %p86 = por %p84, %p85
    %p88 = scmp.ne.s32.totalorder %s73, %s87
    %p89 = scmp.eq.s32.totalorder %s21, 0
    %p90 = por %p88, %p89
    %s92 = sadd.s32 %s91, 1
    %p95 = scmp.eq.s32.totalorder %s15, 1
    %p96 = scmp.ne.s32.totalorder %s91, %s93
    %p97 = scmp.eq.s32.totalorder %s15, 0
    %p98 = por %p96, %p97
    %p99 = scmp.ne.s32.totalorder %s91, %s93
    %p100 = scmp.eq.s32.totalorder %s20, 1
    %p101 = por %p99, %p100
    %p102 = scmp.ne.s32.totalorder %s93, %s94
    %p103 = scmp.eq.s32.totalorder %s20, 0
    %p104 = por %p102, %p103
    %p105 = scmp.ne.s32.totalorder %s93, %s94
    %p106 = scmp.eq.s32.totalorder %s21, 1
    %p107 = por %p105, %p106
    %p109 = scmp.ne.s32.totalorder %s94, %s108
    %p110 = scmp.eq.s32.totalorder %s21, 0
    %p111 = por %p109, %p110
    %s113 = sadd.s32 %s112, 1
    %p116 = scmp.eq.s32.totalorder %s15, 1
    %p117 = scmp.ne.s32.totalorder %s112, %s114
    %p118 = scmp.eq.s32.totalorder %s15, 0
    %p119 = por %p117, %p118
    %p120 = scmp.ne.s32.totalorder %s112, %s114
    %p121 = scmp.eq.s32.totalorder %s20, 1
    %p122 = por %p120, %p121
    %p123 = scmp.ne.s32.totalorder %s114, %s115
    %p124 = scmp.eq.s32.totalorder %s20, 0
    %p125 = por %p123, %p124
    %p126 = scmp.ne.s32.totalorder %s114, %s115
    %p127 = scmp.eq.s32.totalorder %s21, 1
    %p128 = por %p126, %p127
    %p130 = scmp.ne.s32.totalorder %s115, %s129
    %p131 = scmp.eq.s32.totalorder %s21, 0
    %p132 = por %p130, %p131
    %s134 = sadd.s32 %s133, 1
    %p137 = scmp.eq.s32.totalorder %s15, 1
    %p138 = scmp.ne.s32.totalorder %s133, %s135
    %p139 = scmp.eq.s32.totalorder %s15, 0
    %p140 = por %p138, %p139
    %p141 = scmp.ne.s32.totalorder %s133, %s135
    %p142 = scmp.eq.s32.totalorder %s20, 1
    %p143 = por %p141, %p142
    %p144 = scmp.ne.s32.totalorder %s135, %s136
    %p145 = scmp.eq.s32.totalorder %s20, 0
    %p146 = por %p144, %p145
    %p147 = scmp.ne.s32.totalorder %s135, %s136
    %p148 = scmp.eq.s32.totalorder %s21, 1
    %p149 = por %p147, %p148
    %p151 = scmp.ne.s32.totalorder %s136, %s150
    %p152 = scmp.eq.s32.totalorder %s21, 0
    %p153 = por %p151, %p152
    %s155 = sadd.s32 %s154, 1
    %p158 = scmp.eq.s32.totalorder %s15, 1
    %p159 = scmp.ne.s32.totalorder %s154, %s156
    %p160 = scmp.eq.s32.totalorder %s15, 0
    %p161 = por %p159, %p160
    %p162 = scmp.ne.s32.totalorder %s154, %s156
    %p163 = scmp.eq.s32.totalorder %s20, 1
    %p164 = por %p162, %p163
    %p165 = scmp.ne.s32.totalorder %s156, %s157
    %p166 = scmp.eq.s32.totalorder %s20, 0
    %p167 = por %p165, %p166
    %p168 = scmp.ne.s32.totalorder %s156, %s157
    %p169 = scmp.eq.s32.totalorder %s21, 1
    %p170 = por %p168, %p169
    %p172 = scmp.ne.s32.totalorder %s157, %s171
    %p173 = scmp.eq.s32.totalorder %s21, 0
    %p174 = por %p172, %p173
    %s176 = sadd.s32 %s175, 1
    %p179 = scmp.eq.s32.totalorder %s15, 1
    %p180 = scmp.ne.s32.totalorder %s175, %s177
    %p181 = scmp.eq.s32.totalorder %s15, 0
    %p182 = por %p180, %p181
    %p183 = scmp.ne.s32.totalorder %s175, %s177
    %p184 = scmp.eq.s32.totalorder %s20, 1
    %p185 = por %p183, %p184
    %p186 = scmp.ne.s32.totalorder %s177, %s178
    %p187 = scmp.eq.s32.totalorder %s20, 0
    %p188 = por %p186, %p187
    %p189 = scmp.ne.s32.totalorder %s177, %s178
    %p190 = scmp.eq.s32.totalorder %s21, 1
    %p191 = por %p189, %p190
    %p193 = scmp.ne.s32.totalorder %s178, %s192
    %p194 = scmp.eq.s32.totalorder %s21, 0
    %p195 = por %p193, %p194
    %s197 = sadd.s32 %s196, 1
    %p200 = scmp.eq.s32.totalorder %s15, 1
    %p201 = scmp.ne.s32.totalorder %s196, %s198
    %p202 = scmp.eq.s32.totalorder %s15, 0
    %p203 = por %p201, %p202
    %p204 = scmp.ne.s32.totalorder %s196, %s198
    %p205 = scmp.eq.s32.totalorder %s20, 1
    %p206 = por %p204, %p205
    %p207 = scmp.ne.s32.totalorder %s198, %s199
    %p208 = scmp.eq.s32.totalorder %s20, 0
    %p209 = por %p207, %p208
    %p210 = scmp.ne.s32.totalorder %s198, %s199
    %p211 = scmp.eq.s32.totalorder %s21, 1
    %p212 = por %p210, %p211
    %p214 = scmp.ne.s32.totalorder %s199, %s213
    %p215 = scmp.eq.s32.totalorder %s21, 0
    %p216 = por %p214, %p215
    %s217 = ssub.s32 %s15, %s22
    %p218 = scmp.eq.s32.totalorder %s217, 0
    %s220 = sadd.s32 %s219, 1
    %s221 = scalar_select %p218, %s219, %s220
    %p224 = pneg %p218
    %p225 = scmp.eq.s32.totalorder %s15, 1
    %p226 = por %p224, %p225
    %p227 = scmp.ne.s32.totalorder %s219, %s222
    %p228 = scmp.eq.s32.totalorder %s15, 0
    %p229 = por %p227, %p228
    %p230 = scmp.ne.s32.totalorder %s219, %s222
    %p231 = scmp.eq.s32.totalorder %s20, 1
    %p232 = por %p230, %p231
    %p233 = scmp.ne.s32.totalorder %s222, %s223
    %p234 = scmp.eq.s32.totalorder %s20, 0
    %p235 = por %p233, %p234
    %p236 = scmp.ne.s32.totalorder %s222, %s223
    %p237 = scmp.eq.s32.totalorder %s21, 1
    %p238 = por %p236, %p237
    %p240 = scmp.ne.s32.totalorder %s223, %s239
    %p241 = scmp.eq.s32.totalorder %s21, 0
    %p242 = por %p240, %p241
    %p243 = scmp.le.s32.totalorder 1, %s15
    %p244 = scmp.lt.s32.totalorder %s15, 3
    %p245 = pnand %p243, %p244
    %p246 = pneg %p245
    // Predicated region
    $region9: #{pixel_pose_forward.1} parent=5 // pred_check
      _
    $region10: #{pixel_pose_forward.1} parent=5 // pred_check_branch
      %248 = sbr.rel (%p245) target = $region12
    $region11: #{pixel_pose_forward.1} parent=5 // pred_region
      %s249 = ssub.s32 %s15, 1
      // Predicated region
      $region13: #{pixel_pose_forward.1} parent=11 // pred_check
        %p250 = pneg %p62
      $region14: #{pixel_pose_forward.1} parent=11 // pred_check_branch
        %252 = sbr.rel (%p250) target = $region16
      $region15: #{pixel_pose_forward.1} parent=11 // pred_region
        _
      $region16: #{pixel_pose_forward.1} parent=11 // pred_fallthru
        _
      // Predicated region
      $region17: #{pixel_pose_forward.1} parent=11 // pred_check
        %p253 = pneg %p83
      $region18: #{pixel_pose_forward.1} parent=11 // pred_check_branch
        %255 = sbr.rel (%p253) target = $region20
      $region19: #{pixel_pose_forward.1} parent=11 // pred_region
        _
      $region20: #{pixel_pose_forward.1} parent=11 // pred_fallthru
        _
      // Predicated region
      $region21: #{pixel_pose_forward.1} parent=11 // pred_check
        %p256 = pneg %p104
      $region22: #{pixel_pose_forward.1} parent=11 // pred_check_branch
        %258 = sbr.rel (%p256) target = $region24
      $region23: #{pixel_pose_forward.1} parent=11 // pred_region
        _
      $region24: #{pixel_pose_forward.1} parent=11 // pred_fallthru
        _
      // Predicated region
      $region25: #{pixel_pose_forward.1} parent=11 // pred_check
        %p259 = pneg %p125
      $region26: #{pixel_pose_forward.1} parent=11 // pred_check_branch
        %261 = sbr.rel (%p259) target = $region28
      $region27: #{pixel_pose_forward.1} parent=11 // pred_region
        _
      $region28: #{pixel_pose_forward.1} parent=11 // pred_fallthru
        _
      // Predicated region
      $region29: #{pixel_pose_forward.1} parent=11 // pred_check
        %p262 = pneg %p146
      $region30: #{pixel_pose_forward.1} parent=11 // pred_check_branch
        %264 = sbr.rel (%p262) target = $region32
      $region31: #{pixel_pose_forward.1} parent=11 // pred_region
        _
      $region32: #{pixel_pose_forward.1} parent=11 // pred_fallthru
        _
      // Predicated region
      $region33: #{pixel_pose_forward.1} parent=11 // pred_check
        %p265 = pneg %p167
      $region34: #{pixel_pose_forward.1} parent=11 // pred_check_branch
        %267 = sbr.rel (%p265) target = $region36
      $region35: #{pixel_pose_forward.1} parent=11 // pred_region
        _
      $region36: #{pixel_pose_forward.1} parent=11 // pred_fallthru
        _
      // Predicated region
      $region37: #{pixel_pose_forward.1} parent=11 // pred_check
        %p268 = pneg %p188
      $region38: #{pixel_pose_forward.1} parent=11 // pred_check_branch
        %270 = sbr.rel (%p268) target = $region40
      $region39: #{pixel_pose_forward.1} parent=11 // pred_region
        _
      $region40: #{pixel_pose_forward.1} parent=11 // pred_fallthru
        _
      // Predicated region
      $region41: #{pixel_pose_forward.1} parent=11 // pred_check
        %p271 = pneg %p209
      $region42: #{pixel_pose_forward.1} parent=11 // pred_check_branch
        %273 = sbr.rel (%p271) target = $region44
      $region43: #{pixel_pose_forward.1} parent=11 // pred_region
        _
      $region44: #{pixel_pose_forward.1} parent=11 // pred_fallthru
        _
    $region12: #{pixel_pose_forward.1} parent=5 // pred_fallthru
      _
    %p274 = scmp.lt.s32.totalorder %s15, 2
    // Predicated region
    $region45: #{pixel_pose_forward.1} parent=5 // pred_check
      %p275 = pneg %p274
    $region46: #{pixel_pose_forward.1} parent=5 // pred_check_branch
      %277 = sbr.rel (%p275) target = $region48
    $region47: #{pixel_pose_forward.1} parent=5 // pred_region
      // Predicated region
      $region49: #{pixel_pose_forward.1} parent=47 // pred_check
        %p278 = pneg %p35
      $region50: #{pixel_pose_forward.1} parent=47 // pred_check_branch
        %280 = sbr.rel (%p278) target = $region52
      $region51: #{pixel_pose_forward.1} parent=47 // pred_region
        %p281 = scmp.lt.s32.totalorder %s15, 1
        %s282 = scalar_select %p281, %s15, 1
        %s283 = smul.addr %s282, 8
        %s284 = scalar_lea.vmem %s0, %s283
      $region52: #{pixel_pose_forward.1} parent=47 // pred_fallthru
        _
    $region48: #{pixel_pose_forward.1} parent=5 // pred_fallthru
      _
    %p285 = scmp.le.s32.totalorder 1, %s15
    %p286 = scmp.lt.s32.totalorder %s15, 3
    %p287 = pnand %p285, %p286
    %p288 = pneg %p287
    // Predicated region
    $region53: #{pixel_pose_forward.1} parent=5 // pred_check
      _
    $region54: #{pixel_pose_forward.1} parent=5 // pred_check_branch
      %290 = sbr.rel (%p287) target = $region56
    $region55: #{pixel_pose_forward.1} parent=5 // pred_region
      %s291 = ssub.s32 %s15, 1
      %p292 = scmp.lt.s32.totalorder %s20, 1
      %s293 = scalar_select %p292, %s20, 1
      %s294 = smul.addr %s293, 8
      %s295 = scalar_lea.vmem %s0, %s294
      %p296 = pneg %p41
      %p297 = pneg %p38
      %p298 = pneg %p62
      %p299 = pneg %p59
      %p300 = pneg %p83
      %p301 = pneg %p80
      %p302 = pneg %p104
      %p303 = pneg %p101
      %p304 = pneg %p125
      %p305 = pneg %p122
      %p306 = pneg %p146
      %p307 = pneg %p143
      %p308 = pneg %p167
      %p309 = pneg %p164
      %p310 = pneg %p188
      %p311 = pneg %p185
      %p312 = pneg %p209
      %p313 = pneg %p206
      %p314 = pneg %p235
      %p315 = pneg %p232
      %p316 = scmp.lt.s32.totalorder %s20, 1
      %s317 = scalar_select %p316, %s20, 1
      %s318 = smul.addr %s317, 8
      %s319 = scalar_lea.vmem %s9, %s318
      %p320 = scmp.lt.s32.totalorder %s20, 1
      %s321 = scalar_select %p320, %s20, 1
      %s322 = smul.addr %s321, 8
      %s323 = scalar_lea.vmem %s0, %s322
      %p324 = scmp.lt.s32.totalorder %s20, 1
      %s325 = scalar_select %p324, %s20, 1
      %s326 = smul.addr %s325, 8
      %s327 = scalar_lea.vmem %s9, %s326
      %v328 = vld [vmem:[%s323] sm:$0xff]
      %330 = vrot.lane.b32.xlu0 %v328, 3
      %v331 = vpop.permute.xlu0 %330
      %333 = vrot.lane.b32.xlu0 %v328, 6
      %v334 = vpop.permute.xlu0 %333
      %336 = vrot.lane.b32.xlu0 %v328, 9
      %v337 = vpop.permute.xlu0 %336
      %339 = vrot.lane.b32.xlu0 %v328, 12
      %v340 = vpop.permute.xlu0 %339
      %342 = vrot.lane.b32.xlu0 %v328, 15
      %v343 = vpop.permute.xlu0 %342
      %345 = vrot.lane.b32.xlu0 %v328, 18
      %v346 = vpop.permute.xlu0 %345
      %348 = vrot.lane.b32.xlu0 %v328, 21
      %v349 = vpop.permute.xlu0 %348
      %351 = vrot.lane.b32.xlu0 %v328, 24
      %v352 = vpop.permute.xlu0 %351
      %354 = vrot.lane.b32.xlu0 %v328, 27
      %v355 = vpop.permute.xlu0 %354
      %vm357 = vcmask 23552
      %v358 = vsel %vm357, %v328, %v331
      %vm359 = vcmask 48128
      %v360 = vsel %vm359, %v358, %v334
      %vm361 = vcmask 72704
      %v362 = vsel %vm361, %v360, %v337
      %vm363 = vcmask 97280
      %v364 = vsel %vm363, %v362, %v340
      %vm365 = vcmask 121856
      %v366 = vsel %vm365, %v364, %v343
      %vm367 = vcmask 146432
      %v368 = vsel %vm367, %v366, %v346
      %vm369 = vcmask 171008
      %v370 = vsel %vm369, %v368, %v349
      %vm371 = vcmask 195584
      %v372 = vsel %vm371, %v370, %v352
      %vm373 = vcmask 220160
      %v374 = vsel %vm373, %v372, %v355
      %v375 = vld [vmem:[%s1] sm:$0x1]
      %v377 = vlaneseq
      %v378 = vshrl.u32 %v377, 7
      %v379 = vsub.s32 0, %v378
      %v380 = vrot.slane %v375, %v379
      %v382 = vmul.f32 %v374, %v380
      %v383 = vand.u32 2147483647, %v382
      %vm384 = vcmp.le.f32.partialorder %v383, 0.7853982
      %vm385 = vcmp.lt.s32.totalorder %v382, 0
      %v386 = vand.u32 %v382, 2139095040
      %v387 = vshrl.u32 %v386, 23
      %v388 = vsub.s32 %v387, 127
      %v389 = vand.u32 2147483647, %v382
      %v390 = vand.u32 %v389, 8388607
      %v391 = vor.u32 %v390, 8388608
      %v392 = vsub.s32 0, %v391
      %v393 = vadd.s32 %v388, 1
      %vm394 = vcmp.gt.s32.totalorder %v393, 0
      %v395 = vsel %vm394, %v393, 0
      %v396 = vshrl.u32 %v395, 5
      %v397 = vand.u32 %v395, 31
      %v398 = vsub.s32 32, %v397
      %v399 = vshrl.u32 683565275, %v398
      %v400 = vshll.u32 683565275, %v397
      %v401 = vshrl.u32 2475754826, %v398
      %v402 = vor.u32 %v400, %v401
      %v403 = vshll.u32 2475754826, %v397
      %v404 = vshrl.u32 2131351028, %v398
      %v405 = vor.u32 %v403, %v404
      %v406 = vshll.u32 2131351028, %v397
      %v407 = vshrl.u32 2102212464, %v398
      %v408 = vor.u32 %v406, %v407
      %v409 = vshll.u32 2102212464, %v397
      %v410 = vshrl.u32 920167782, %v398
      %v411 = vor.u32 %v409, %v410
      %v412 = vshll.u32 920167782, %v397
      %v413 = vshrl.u32 1326507024, %v398
      %v414 = vor.u32 %v412, %v413
      %vm415 = vcmp.lt.s32.totalorder %v396, 1
      %vm416 = vcmp.lt.s32.totalorder %v396, 2
      %vm417 = vcmp.lt.s32.totalorder %v396, 3
      %vm418 = vcmp.lt.s32.totalorder %v396, 4
      %v419 = vsel %vm415, %v399, %v402
      %v420 = vsel %vm418, %v408, 2102212464
      %v421 = vsel %vm417, %v405, %v420
      %v422 = vsel %vm416, %v419, %v421
      %v423 = vsel %vm415, %v402, %v405
      %v424 = vsel %vm418, %v411, 920167782
      %v425 = vsel %vm417, %v408, %v424
      %v426 = vsel %vm416, %v423, %v425
      %v427 = vsel %vm415, %v405, %v408
      %v428 = vsel %vm418, %v414, 1326507024
      %v429 = vsel %vm417, %v411, %v428
      %v430 = vsel %vm416, %v427, %v429
      %v431 = vshll.u32 %v391, 8
      %v432 = vmul.u32.u64.compose %v431, %v430
      %v433 = vextract.low.u32 %v432
      %v434 = vextract.high.u32 %v432
      %v435 = vmul.u32.u64.compose %v431, %v426
      %v436 = vextract.low.u32 %v435
      %v437 = vextract.high.u32 %v435
      %v438 = vmul.u32 %v431, %v422
      %v439 = vadd.s32 %v434, %v436
      %vm440 = vc.u32 %v434, %v436
      %v441 = vadd.s32 %v437, 1
      %v442 = vsel %vm440, %v441, %v437
      %v443 = vadd.s32 %v438, %v442
      %v444 = vadd.s32 %v443, 536870912
      %v445 = vshrl.u32 %v444, 30
      %v446 = vshll.u32 %v445, 30
      %v447 = vsub.s32 %v443, %v446
      %vm448 = vcmp.lt.s32.totalorder %v447, 0
      %v449 = vsub.s32 0, %v447
      %v450 = vsel %vm448, %v449, %v447
      %v451 = vclz %v450
      %v452 = vsub.s32 %v451, 2
      %vm453 = vcmp.gt.s32.totalorder 0, %v452
      %v454 = vsel %vm453, 0, %v452
      %v455 = vsub.s32 32, %v454
      %v456 = vshll.u32 %v447, %v454
      %v457 = vshrl.u32 %v439, %v455
      %v458 = vor.u32 %v456, %v457
      %v459 = vsub.s32 4294967266, %v454
      %v460 = vadd.s32 %v459, 127
      %v461 = vshll.u32 %v460, 23
      %v462 = vor.u32 4788187, %v461
      %v463 = vand.u32 2147483647, %v462
      %v465 = vcvt.s32.f32 %v458
      %v466 = vmul.f32 %v465, %v463
      %v467 = vxor.u32 %v466, 2147483648
      %v468 = vsel %vm385, %v467, %v466
      %v469 = vsub.s32 4, %v445
      %v470 = vsel %vm385, %v469, %v445
      %v471 = vsel %vm384, %v382, %v468
      %v472 = vsel %vm384, 0, %v470
      %v473 = vcosq.f32.pop %v471
      %v474 = vsinq.f32.pop %v471
      %vm475 = vweird.f32 %v382
      %v476 = vadd.s32 %v472, 3
      %v477 = vand.u32 %v476, 3
      %vm478 = vcmp.lt.s32.totalorder %v477, 2
      %vm479 = vcmp.eq.s32.totalorder %v477, 0
      %v480 = vxor.u32 %v474, 2147483648
      %v481 = vsel %vm479, %v473, %v480
      %vm482 = vcmp.eq.s32.totalorder %v477, 2
      %v483 = vxor.u32 %v473, 2147483648
      %v484 = vsel %vm482, %v483, %v474
      %v485 = vsel %vm478, %v481, %v484
      %v486 = vsel %vm475, nan, %v485
      %v487 = vand.u32 2147483647, %v382
      %vm488 = vcmp.le.f32.partialorder %v487, 0.7853982
      %vm489 = vcmp.lt.s32.totalorder %v382, 0
      %v490 = vand.u32 %v382, 2139095040
      %v491 = vshrl.u32 %v490, 23
      %v492 = vsub.s32 %v491, 127
      %v493 = vand.u32 2147483647, %v382
      %v494 = vand.u32 %v493, 8388607
      %v495 = vor.u32 %v494, 8388608
      %v496 = vsub.s32 0, %v495
      %v497 = vadd.s32 %v492, 1
      %vm498 = vcmp.gt.s32.totalorder %v497, 0
      %v499 = vsel %vm498, %v497, 0
      %v500 = vshrl.u32 %v499, 5
      %v501 = vand.u32 %v499, 31
      %v502 = vsub.s32 32, %v501
      %v503 = vshrl.u32 683565275, %v502
      %v504 = vshll.u32 683565275, %v501
      %v505 = vshrl.u32 2475754826, %v502
      %v506 = vor.u32 %v504, %v505
      %v507 = vshll.u32 2475754826, %v501
      %v508 = vshrl.u32 2131351028, %v502
      %v509 = vor.u32 %v507, %v508
      %v510 = vshll.u32 2131351028, %v501
      %v511 = vshrl.u32 2102212464, %v502
      %v512 = vor.u32 %v510, %v511
      %v513 = vshll.u32 2102212464, %v501
      %v514 = vshrl.u32 920167782, %v502
      %v515 = vor.u32 %v513, %v514
      %v516 = vshll.u32 920167782, %v501
      %v517 = vshrl.u32 1326507024, %v502
      %v518 = vor.u32 %v516, %v517
      %vm519 = vcmp.lt.s32.totalorder %v500, 1
      %vm520 = vcmp.lt.s32.totalorder %v500, 2
      %vm521 = vcmp.lt.s32.totalorder %v500, 3
      %vm522 = vcmp.lt.s32.totalorder %v500, 4
      %v523 = vsel %vm519, %v503, %v506
      %v524 = vsel %vm522, %v512, 2102212464
      %v525 = vsel %vm521, %v509, %v524
      %v526 = vsel %vm520, %v523, %v525
      %v527 = vsel %vm519, %v506, %v509
      %v528 = vsel %vm522, %v515, 920167782
      %v529 = vsel %vm521, %v512, %v528
      %v530 = vsel %vm520, %v527, %v529
      %v531 = vsel %vm519, %v509, %v512
      %v532 = vsel %vm522, %v518, 1326507024
      %v533 = vsel %vm521, %v515, %v532
      %v534 = vsel %vm520, %v531, %v533
      %v535 = vshll.u32 %v495, 8
      %v536 = vmul.u32.u64.compose %v535, %v534
      %v537 = vextract.low.u32 %v536
      %v538 = vextract.high.u32 %v536
      %v539 = vmul.u32.u64.compose %v535, %v530
      %v540 = vextract.low.u32 %v539
      %v541 = vextract.high.u32 %v539
      %v542 = vmul.u32 %v535, %v526
      %v543 = vadd.s32 %v538, %v540
      %vm544 = vc.u32 %v538, %v540
      %v545 = vadd.s32 %v541, 1
      %v546 = vsel %vm544, %v545, %v541
      %v547 = vadd.s32 %v542, %v546
      %v548 = vadd.s32 %v547, 536870912
      %v549 = vshrl.u32 %v548, 30
      %v550 = vshll.u32 %v549, 30
      %v551 = vsub.s32 %v547, %v550
      %vm552 = vcmp.lt.s32.totalorder %v551, 0
      %v553 = vsub.s32 0, %v551
      %v554 = vsel %vm552, %v553, %v551
      %v555 = vclz %v554
      %v556 = vsub.s32 %v555, 2
      %vm557 = vcmp.gt.s32.totalorder 0, %v556
      %v558 = vsel %vm557, 0, %v556
      %v559 = vsub.s32 32, %v558
      %v560 = vshll.u32 %v551, %v558
      %v561 = vshrl.u32 %v543, %v559
      %v562 = vor.u32 %v560, %v561
      %v563 = vsub.s32 4294967266, %v558
      %v564 = vadd.s32 %v563, 127
      %v565 = vshll.u32 %v564, 23
      %v566 = vor.u32 4788187, %v565
      %v567 = vand.u32 2147483647, %v566
      %v569 = vcvt.s32.f32 %v562
      %v570 = vmul.f32 %v569, %v567
      %v571 = vxor.u32 %v570, 2147483648
      %v572 = vsel %vm489, %v571, %v570
      %v573 = vsub.s32 4, %v549
      %v574 = vsel %vm489, %v573, %v549
      %v575 = vsel %vm488, %v382, %v572
      %v576 = vsel %vm488, 0, %v574
      %v577 = vcosq.f32.pop %v575
      %v578 = vsinq.f32.pop %v575
      %vm579 = vweird.f32 %v382
      %v580 = vand.u32 %v576, 3
      %vm581 = vcmp.lt.s32.totalorder %v580, 2
      %vm582 = vcmp.eq.s32.totalorder %v580, 0
      %v583 = vxor.u32 %v578, 2147483648
      %v584 = vsel %vm582, %v577, %v583
      %vm585 = vcmp.eq.s32.totalorder %v580, 2
      %v586 = vxor.u32 %v577, 2147483648
      %v587 = vsel %vm585, %v586, %v578
      %v588 = vsel %vm581, %v584, %v587
      %v589 = vsel %vm579, nan, %v588
      %591 = vrot.lane.b32.xlu0 %v486, 3
      %v592 = vpop.permute.xlu0 %591
      %595 = vrot.lane.b32.xlu0 %v589, 33
      %v596 = vpop.permute.xlu0 %595
      %v598 = vsel %vm357, %v328, %v592
      %vm599 = vcmask 269312
      %v600 = vsel %vm599, %v598, %v596
      %v601 = vld [vmem:[%s2] sm:$0xff]
      %v602 = vld [vmem:[%s2 + $0x8] sm:$0xff]
      %v603 = vld [vmem:[%s2 + $0x10] sm:$0xff]
      %v604 = vld [vmem:[%s2 + $0x18] sm:$0xff]
      %v605 = vld [vmem:[%s2 + $0x20] sm:$0xff]
      %v606 = vld [vmem:[%s2 + $0x28] sm:$0xff]
      %v607 = vld [vmem:[%s2 + $0x30] sm:$0xff]
      %v608 = vld [vmem:[%s2 + $0x38] sm:$0x7f]
      %v609 = vld [vmem:[%s3] sm:$0x1]
      %v611 = vlaneseq
      %v612 = vshrl.u32 %v611, 7
      %v613 = vsub.s32 0, %v612
      %v614 = vrot.slane %v609, %v613
      %vm616 = vcmask 515072
      %v618 = vsel %vm616, %v600, 0
      %vm620 = vcmask 1046528
      %v622 = vsel %vm620, %v608, 0
      %624 = vmatprep.subr.mxu0 0.0
      %v625 = vand.u32 %v601, 4294901760
      %626 = vmatpush1.msra.mxu0 %v625
      %627 = vmatprep.subr.mxu0 0.0
      %v628 = vand.u32 %v602, 4294901760
      %629 = vmatpush1.msra.mxu0 %v628
      %630 = vmatprep.subr.mxu0 0.0
      %v631 = vand.u32 %v603, 4294901760
      %632 = vmatpush1.msra.mxu0 %v631
      %633 = vmatprep.subr.mxu0 0.0
      %v634 = vand.u32 %v604, 4294901760
      %635 = vmatpush1.msra.mxu0 %v634
      %636 = vmatprep.subr.mxu0 0.0
      %v637 = vand.u32 %v605, 4294901760
      %638 = vmatpush1.msra.mxu0 %v637
      %639 = vmatprep.subr.mxu0 0.0
      %v640 = vand.u32 %v606, 4294901760
      %641 = vmatpush1.msra.mxu0 %v640
      %642 = vmatprep.subr.mxu0 0.0
      %v643 = vand.u32 %v607, 4294901760
      %644 = vmatpush1.msra.mxu0 %v643
      %645 = vmatprep.subr.mxu0 0.0
      %v646 = vand.u32 %v622, 4294901760
      %647 = vmatpush1.msra.mxu0 %v646
      %648 = vmatprep.subr.mxu0 0.0
      %649 = vmatpush1.msra.mxu0 0.0
      %650 = vmatprep.subr.mxu0 0.0
      %651 = vmatpush1.msra.mxu0 0.0
      %652 = vmatprep.subr.mxu0 0.0
      %653 = vmatpush1.msra.mxu0 0.0
      %654 = vmatprep.subr.mxu0 0.0
      %655 = vmatpush1.msra.mxu0 0.0
      %656 = vmatprep.subr.mxu0 0.0
      %657 = vmatpush1.msra.mxu0 0.0
      %658 = vmatprep.subr.mxu0 0.0
      %659 = vmatpush1.msra.mxu0 0.0
      %660 = vmatprep.subr.mxu0 0.0
      %661 = vmatpush1.msra.mxu0 0.0
      %662 = vmatprep.subr.mxu0 0.0
      %663 = vmatpush1.msra.mxu0 0.0
      %664 = vmatprep.subr.mxu0 0.0
      %665 = vmatpush1.msra.mxu0 0.0
      %666 = vmatprep.subr.mxu0 0.0
      %667 = vmatpush1.msra.mxu0 0.0
      %668 = vmatprep.subr.mxu0 0.0
      %669 = vmatpush1.msra.mxu0 0.0
      %670 = vmatprep.subr.mxu0 0.0
      %671 = vmatpush1.msra.mxu0 0.0
      %672 = vmatprep.subr.mxu0 0.0
      %673 = vmatpush1.msra.mxu0 0.0
      %674 = vmatprep.subr.mxu0 0.0
      %675 = vmatpush1.msra.mxu0 0.0
      %676 = vmatprep.subr.mxu0 0.0
      %677 = vmatpush1.msra.mxu0 0.0
      %678 = vmatprep.subr.mxu0 0.0
      %679 = vmatpush1.msra.mxu0 0.0
      %680 = vmatprep.subr.mxu0 0.0
      %681 = vmatpush1.msra.mxu0 0.0
      %682 = vmatprep.subr.mxu0 0.0
      %683 = vmatpush1.msra.mxu0 0.0
      %684 = vmatprep.subr.mxu0 0.0
      %685 = vmatpush1.msra.mxu0 0.0
      %686 = vmatprep.subr.mxu0 0.0
      %687 = vmatpush1.msra.mxu0 0.0
      %688 = vmatprep.subr.mxu0 0.0
      %689 = vmatpush1.msra.mxu0 0.0
      %690 = vmatprep.subr.mxu0 0.0
      %691 = vmatpush1.msra.mxu0 0.0
      %692 = vmatprep.subr.mxu0 0.0
      %693 = vmatpush1.msra.mxu0 0.0
      %694 = vmatprep.subr.mxu0 0.0
      %695 = vmatpush1.msra.mxu0 0.0
      %696 = vmatprep.mubr.f32.mxu0 0.0
      %v697 = vand.u32 %v618, 4294901760
      %v698 = vsub.f32 %v618, %v697
      %v699 = vand.u32 %v698, 4294901760
      %v700 = vsub.f32 %v698, %v699
      %v701 = vand.u32 %v700, 4294901760
      %702 = vmatmul.mubr.f32.gmra.mrb[0].mxu0 %v701
      %v703 = vpop.f32.mrb[0].mxu0
      %v704 = vadd.f32 %v614, %v703
      %v705 = vpop.f32.mrb[0].mxu0
      %706 = vdwg.mxu0
      %707 = vmatprep.subr.mxu0 0.0
      %v708 = vand.u32 %v601, 4294901760
      %v709 = vsub.f32 %v601, %v708
      %v710 = vand.u32 %v709, 4294901760
      %v711 = vsub.f32 %v709, %v710
      %v712 = vand.u32 %v711, 4294901760
      %713 = vmatpush1.msra.mxu0 %v712
      %714 = vmatprep.subr.mxu0 0.0
      %v715 = vand.u32 %v602, 4294901760
      %v716 = vsub.f32 %v602, %v715
      %v717 = vand.u32 %v716, 4294901760
      %v718 = vsub.f32 %v716, %v717
      %v719 = vand.u32 %v718, 4294901760
      %720 = vmatpush1.msra.mxu0 %v719
      %721 = vmatprep.subr.mxu0 0.0
      %v722 = vand.u32 %v603, 4294901760
      %v723 = vsub.f32 %v603, %v722
      %v724 = vand.u32 %v723, 4294901760
      %v725 = vsub.f32 %v723, %v724
      %v726 = vand.u32 %v725, 4294901760
      %727 = vmatpush1.msra.mxu0 %v726
      %728 = vmatprep.subr.mxu0 0.0
      %v729 = vand.u32 %v604, 4294901760
      %v730 = vsub.f32 %v604, %v729
      %v731 = vand.u32 %v730, 4294901760
      %v732 = vsub.f32 %v730, %v731
      %v733 = vand.u32 %v732, 4294901760
      %734 = vmatpush1.msra.mxu0 %v733
      %735 = vmatprep.subr.mxu0 0.0
      %v736 = vand.u32 %v605, 4294901760
      %v737 = vsub.f32 %v605, %v736
      %v738 = vand.u32 %v737, 4294901760
      %v739 = vsub.f32 %v737, %v738
      %v740 = vand.u32 %v739, 4294901760
      %741 = vmatpush1.msra.mxu0 %v740
      %742 = vmatprep.subr.mxu0 0.0
      %v743 = vand.u32 %v606, 4294901760
      %v744 = vsub.f32 %v606, %v743
      %v745 = vand.u32 %v744, 4294901760
      %v746 = vsub.f32 %v744, %v745
      %v747 = vand.u32 %v746, 4294901760
      %748 = vmatpush1.msra.mxu0 %v747
      %749 = vmatprep.subr.mxu0 0.0
      %v750 = vand.u32 %v607, 4294901760
      %v751 = vsub.f32 %v607, %v750
      %v752 = vand.u32 %v751, 4294901760
      %v753 = vsub.f32 %v751, %v752
      %v754 = vand.u32 %v753, 4294901760
      %755 = vmatpush1.msra.mxu0 %v754
      %756 = vmatprep.subr.mxu0 0.0
      %v757 = vand.u32 %v622, 4294901760
      %v758 = vsub.f32 %v622, %v757
      %v759 = vand.u32 %v758, 4294901760
      %v760 = vsub.f32 %v758, %v759
      %v761 = vand.u32 %v760, 4294901760
      %762 = vmatpush1.msra.mxu0 %v761
      %763 = vmatprep.subr.mxu0 0.0
      %764 = vmatpush1.msra.mxu0 0.0
      %765 = vmatprep.subr.mxu0 0.0
      %766 = vmatpush1.msra.mxu0 0.0
      %767 = vmatprep.subr.mxu0 0.0
      %768 = vmatpush1.msra.mxu0 0.0
      %769 = vmatprep.subr.mxu0 0.0
      %770 = vmatpush1.msra.mxu0 0.0
      %771 = vmatprep.subr.mxu0 0.0
      %772 = vmatpush1.msra.mxu0 0.0
      %773 = vmatprep.subr.mxu0 0.0
      %774 = vmatpush1.msra.mxu0 0.0
      %775 = vmatprep.subr.mxu0 0.0
      %776 = vmatpush1.msra.mxu0 0.0
      %777 = vmatprep.subr.mxu0 0.0
      %778 = vmatpush1.msra.mxu0 0.0
      %779 = vmatprep.subr.mxu0 0.0
      %780 = vmatpush1.msra.mxu0 0.0
      %781 = vmatprep.subr.mxu0 0.0
      %782 = vmatpush1.msra.mxu0 0.0
      %783 = vmatprep.subr.mxu0 0.0
      %784 = vmatpush1.msra.mxu0 0.0
      %785 = vmatprep.subr.mxu0 0.0
      %786 = vmatpush1.msra.mxu0 0.0
      %787 = vmatprep.subr.mxu0 0.0
      %788 = vmatpush1.msra.mxu0 0.0
      %789 = vmatprep.subr.mxu0 0.0
      %790 = vmatpush1.msra.mxu0 0.0
      %791 = vmatprep.subr.mxu0 0.0
      %792 = vmatpush1.msra.mxu0 0.0
      %793 = vmatprep.subr.mxu0 0.0
      %794 = vmatpush1.msra.mxu0 0.0
      %795 = vmatprep.subr.mxu0 0.0
      %796 = vmatpush1.msra.mxu0 0.0
      %797 = vmatprep.subr.mxu0 0.0
      %798 = vmatpush1.msra.mxu0 0.0
      %799 = vmatprep.subr.mxu0 0.0
      %800 = vmatpush1.msra.mxu0 0.0
      %801 = vmatprep.subr.mxu0 0.0
      %802 = vmatpush1.msra.mxu0 0.0
      %803 = vmatprep.subr.mxu0 0.0
      %804 = vmatpush1.msra.mxu0 0.0
      %805 = vmatprep.subr.mxu0 0.0
      %806 = vmatpush1.msra.mxu0 0.0
      %807 = vmatprep.subr.mxu0 0.0
      %808 = vmatpush1.msra.mxu0 0.0
      %809 = vmatprep.subr.mxu0 0.0
      %810 = vmatpush1.msra.mxu0 0.0
      %811 = vmatprep.mubr.f32.mxu0 0.0
      %v812 = vand.u32 %v618, 4294901760
      %813 = vmatmul.mubr.f32.gmra.mrb[0].mxu0 %v812
      %v814 = vpop.f32.mrb[0].mxu0
      %v815 = vadd.f32 %v704, %v814
      %v816 = vpop.f32.mrb[0].mxu0
      %817 = vdwg.mxu0
      %818 = vmatprep.subr.mxu0 0.0
      %v819 = vand.u32 %v601, 4294901760
      %v820 = vsub.f32 %v601, %v819
      %821 = vmatpush1.msra.mxu0 %v820
      %822 = vmatprep.subr.mxu0 0.0
      %v823 = vand.u32 %v602, 4294901760
      %v824 = vsub.f32 %v602, %v823
      %825 = vmatpush1.msra.mxu0 %v824
      %826 = vmatprep.subr.mxu0 0.0
      %v827 = vand.u32 %v603, 4294901760
      %v828 = vsub.f32 %v603, %v827
      %829 = vmatpush1.msra.mxu0 %v828
      %830 = vmatprep.subr.mxu0 0.0
      %v831 = vand.u32 %v604, 4294901760
      %v832 = vsub.f32 %v604, %v831
      %833 = vmatpush1.msra.mxu0 %v832
      %834 = vmatprep.subr.mxu0 0.0
      %v835 = vand.u32 %v605, 4294901760
      %v836 = vsub.f32 %v605, %v835
      %837 = vmatpush1.msra.mxu0 %v836
      %838 = vmatprep.subr.mxu0 0.0
      %v839 = vand.u32 %v606, 4294901760
      %v840 = vsub.f32 %v606, %v839
      %841 = vmatpush1.msra.mxu0 %v840
      %842 = vmatprep.subr.mxu0 0.0
      %v843 = vand.u32 %v607, 4294901760
      %v844 = vsub.f32 %v607, %v843
      %845 = vmatpush1.msra.mxu0 %v844
      %846 = vmatprep.subr.mxu0 0.0
      %v847 = vand.u32 %v622, 4294901760
      %v848 = vsub.f32 %v622, %v847
      %849 = vmatpush1.msra.mxu0 %v848
      %850 = vmatprep.subr.mxu0 0.0
      %851 = vmatpush1.msra.mxu0 0.0
      %852 = vmatprep.subr.mxu0 0.0
      %853 = vmatpush1.msra.mxu0 0.0
      %854 = vmatprep.subr.mxu0 0.0
      %855 = vmatpush1.msra.mxu0 0.0
      %856 = vmatprep.subr.mxu0 0.0
      %857 = vmatpush1.msra.mxu0 0.0
      %858 = vmatprep.subr.mxu0 0.0
      %859 = vmatpush1.msra.mxu0 0.0
      %860 = vmatprep.subr.mxu0 0.0
      %861 = vmatpush1.msra.mxu0 0.0
      %862 = vmatprep.subr.mxu0 0.0
      %863 = vmatpush1.msra.mxu0 0.0
      %864 = vmatprep.subr.mxu0 0.0
      %865 = vmatpush1.msra.mxu0 0.0
      %866 = vmatprep.subr.mxu0 0.0
      %867 = vmatpush1.msra.mxu0 0.0
      %868 = vmatprep.subr.mxu0 0.0
      %869 = vmatpush1.msra.mxu0 0.0
      %870 = vmatprep.subr.mxu0 0.0
      %871 = vmatpush1.msra.mxu0 0.0
      %872 = vmatprep.subr.mxu0 0.0
      %873 = vmatpush1.msra.mxu0 0.0
      %874 = vmatprep.subr.mxu0 0.0
      %875 = vmatpush1.msra.mxu0 0.0
      %876 = vmatprep.subr.mxu0 0.0
      %877 = vmatpush1.msra.mxu0 0.0
      %878 = vmatprep.subr.mxu0 0.0
      %879 = vmatpush1.msra.mxu0 0.0
      %880 = vmatprep.subr.mxu0 0.0
      %881 = vmatpush1.msra.mxu0 0.0
      %882 = vmatprep.subr.mxu0 0.0
      %883 = vmatpush1.msra.mxu0 0.0
      %884 = vmatprep.subr.mxu0 0.0
      %885 = vmatpush1.msra.mxu0 0.0
      %886 = vmatprep.subr.mxu0 0.0
      %887 = vmatpush1.msra.mxu0 0.0
      %888 = vmatprep.subr.mxu0 0.0
      %889 = vmatpush1.msra.mxu0 0.0
      %890 = vmatprep.subr.mxu0 0.0
      %891 = vmatpush1.msra.mxu0 0.0
      %892 = vmatprep.subr.mxu0 0.0
      %893 = vmatpush1.msra.mxu0 0.0
      %894 = vmatprep.subr.mxu0 0.0
      %895 = vmatpush1.msra.mxu0 0.0
      %896 = vmatprep.subr.mxu0 0.0
      %897 = vmatpush1.msra.mxu0 0.0
      %898 = vmatprep.mubr.f32.mxu0 0.0
      %v899 = vand.u32 %v618, 4294901760
      %v900 = vsub.f32 %v618, %v899
      %901 = vmatmul.mubr.f32.gmra.mrb[0].mxu0 %v900
      %v902 = vpop.f32.mrb[0].mxu0
      %v903 = vadd.f32 %v815, %v902
      %v904 = vpop.f32.mrb[0].mxu0
      %905 = vdwg.mxu0
      %906 = vmatprep.subr.mxu0 0.0
      %v907 = vand.u32 %v601, 4294901760
      %908 = vmatpush1.msra.mxu0 %v907
      %909 = vmatprep.subr.mxu0 0.0
      %v910 = vand.u32 %v602, 4294901760
      %911 = vmatpush1.msra.mxu0 %v910
      %912 = vmatprep.subr.mxu0 0.0
      %v913 = vand.u32 %v603, 4294901760
      %914 = vmatpush1.msra.mxu0 %v913
      %915 = vmatprep.subr.mxu0 0.0
      %v916 = vand.u32 %v604, 4294901760
      %917 = vmatpush1.msra.mxu0 %v916
      %918 = vmatprep.subr.mxu0 0.0
      %v919 = vand.u32 %v605, 4294901760
      %920 = vmatpush1.msra.mxu0 %v919
      %921 = vmatprep.subr.mxu0 0.0
      %v922 = vand.u32 %v606, 4294901760
      %923 = vmatpush1.msra.mxu0 %v922
      %924 = vmatprep.subr.mxu0 0.0
      %v925 = vand.u32 %v607, 4294901760
      %926 = vmatpush1.msra.mxu0 %v925
      %927 = vmatprep.subr.mxu0 0.0
      %v928 = vand.u32 %v622, 4294901760
      %929 = vmatpush1.msra.mxu0 %v928
      %930 = vmatprep.subr.mxu0 0.0
      %931 = vmatpush1.msra.mxu0 0.0
      %932 = vmatprep.subr.mxu0 0.0
      %933 = vmatpush1.msra.mxu0 0.0
      %934 = vmatprep.subr.mxu0 0.0
      %935 = vmatpush1.msra.mxu0 0.0
      %936 = vmatprep.subr.mxu0 0.0
      %937 = vmatpush1.msra.mxu0 0.0
      %938 = vmatprep.subr.mxu0 0.0
      %939 = vmatpush1.msra.mxu0 0.0
      %940 = vmatprep.subr.mxu0 0.0
      %941 = vmatpush1.msra.mxu0 0.0
      %942 = vmatprep.subr.mxu0 0.0
      %943 = vmatpush1.msra.mxu0 0.0
      %944 = vmatprep.subr.mxu0 0.0
      %945 = vmatpush1.msra.mxu0 0.0
      %946 = vmatprep.subr.mxu0 0.0
      %947 = vmatpush1.msra.mxu0 0.0
      %948 = vmatprep.subr.mxu0 0.0
      %949 = vmatpush1.msra.mxu0 0.0
      %950 = vmatprep.subr.mxu0 0.0
      %951 = vmatpush1.msra.mxu0 0.0
      %952 = vmatprep.subr.mxu0 0.0
      %953 = vmatpush1.msra.mxu0 0.0
      %954 = vmatprep.subr.mxu0 0.0
      %955 = vmatpush1.msra.mxu0 0.0
      %956 = vmatprep.subr.mxu0 0.0
      %957 = vmatpush1.msra.mxu0 0.0
      %958 = vmatprep.subr.mxu0 0.0
      %959 = vmatpush1.msra.mxu0 0.0
      %960 = vmatprep.subr.mxu0 0.0
      %961 = vmatpush1.msra.mxu0 0.0
      %962 = vmatprep.subr.mxu0 0.0
      %963 = vmatpush1.msra.mxu0 0.0
      %964 = vmatprep.subr.mxu0 0.0
      %965 = vmatpush1.msra.mxu0 0.0
      %966 = vmatprep.subr.mxu0 0.0
      %967 = vmatpush1.msra.mxu0 0.0
      %968 = vmatprep.subr.mxu0 0.0
      %969 = vmatpush1.msra.mxu0 0.0
      %970 = vmatprep.subr.mxu0 0.0
      %971 = vmatpush1.msra.mxu0 0.0
      %972 = vmatprep.subr.mxu0 0.0
      %973 = vmatpush1.msra.mxu0 0.0
      %974 = vmatprep.subr.mxu0 0.0
      %975 = vmatpush1.msra.mxu0 0.0
      %976 = vmatprep.subr.mxu0 0.0
      %977 = vmatpush1.msra.mxu0 0.0
      %978 = vmatprep.mubr.f32.mxu0 0.0
      %v979 = vand.u32 %v618, 4294901760
      %v980 = vsub.f32 %v618, %v979
      %v981 = vand.u32 %v980, 4294901760
      %982 = vmatmul.mubr.f32.gmra.mrb[0].mxu0 %v981
      %v983 = vpop.f32.mrb[0].mxu0
      %v984 = vadd.f32 %v903, %v983
      %v985 = vpop.f32.mrb[0].mxu0
      %986 = vdwg.mxu0
      %987 = vmatprep.subr.mxu0 0.0
      %v988 = vand.u32 %v601, 4294901760
      %v989 = vsub.f32 %v601, %v988
      %v990 = vand.u32 %v989, 4294901760
      %991 = vmatpush1.msra.mxu0 %v990
      %992 = vmatprep.subr.mxu0 0.0
      %v993 = vand.u32 %v602, 4294901760
      %v994 = vsub.f32 %v602, %v993
      %v995 = vand.u32 %v994, 4294901760
      %996 = vmatpush1.msra.mxu0 %v995
      %997 = vmatprep.subr.mxu0 0.0
      %v998 = vand.u32 %v603, 4294901760
      %v999 = vsub.f32 %v603, %v998
      %v1000 = vand.u32 %v999, 4294901760
      %1001 = vmatpush1.msra.mxu0 %v1000
      %1002 = vmatprep.subr.mxu0 0.0
      %v1003 = vand.u32 %v604, 4294901760
      %v1004 = vsub.f32 %v604, %v1003
      %v1005 = vand.u32 %v1004, 4294901760
      %1006 = vmatpush1.msra.mxu0 %v1005
      %1007 = vmatprep.subr.mxu0 0.0
      %v1008 = vand.u32 %v605, 4294901760
      %v1009 = vsub.f32 %v605, %v1008
      %v1010 = vand.u32 %v1009, 4294901760
      %1011 = vmatpush1.msra.mxu0 %v1010
      %1012 = vmatprep.subr.mxu0 0.0
      %v1013 = vand.u32 %v606, 4294901760
      %v1014 = vsub.f32 %v606, %v1013
      %v1015 = vand.u32 %v1014, 4294901760
      %1016 = vmatpush1.msra.mxu0 %v1015
      %1017 = vmatprep.subr.mxu0 0.0
      %v1018 = vand.u32 %v607, 4294901760
      %v1019 = vsub.f32 %v607, %v1018
      %v1020 = vand.u32 %v1019, 4294901760
      %1021 = vmatpush1.msra.mxu0 %v1020
      %1022 = vmatprep.subr.mxu0 0.0
      %v1023 = vand.u32 %v622, 4294901760
      %v1024 = vsub.f32 %v622, %v1023
      %v1025 = vand.u32 %v1024, 4294901760
      %1026 = vmatpush1.msra.mxu0 %v1025
      %1027 = vmatprep.subr.mxu0 0.0
      %1028 = vmatpush1.msra.mxu0 0.0
      %1029 = vmatprep.subr.mxu0 0.0
      %1030 = vmatpush1.msra.mxu0 0.0
      %1031 = vmatprep.subr.mxu0 0.0
      %1032 = vmatpush1.msra.mxu0 0.0
      %1033 = vmatprep.subr.mxu0 0.0
      %1034 = vmatpush1.msra.mxu0 0.0
      %1035 = vmatprep.subr.mxu0 0.0
      %1036 = vmatpush1.msra.mxu0 0.0
      %1037 = vmatprep.subr.mxu0 0.0
      %1038 = vmatpush1.msra.mxu0 0.0
      %1039 = vmatprep.subr.mxu0 0.0
      %1040 = vmatpush1.msra.mxu0 0.0
      %1041 = vmatprep.subr.mxu0 0.0
      %1042 = vmatpush1.msra.mxu0 0.0
      %1043 = vmatprep.subr.mxu0 0.0
      %1044 = vmatpush1.msra.mxu0 0.0
      %1045 = vmatprep.subr.mxu0 0.0
      %1046 = vmatpush1.msra.mxu0 0.0
      %1047 = vmatprep.subr.mxu0 0.0
      %1048 = vmatpush1.msra.mxu0 0.0
      %1049 = vmatprep.subr.mxu0 0.0
      %1050 = vmatpush1.msra.mxu0 0.0
      %1051 = vmatprep.subr.mxu0 0.0
      %1052 = vmatpush1.msra.mxu0 0.0
      %1053 = vmatprep.subr.mxu0 0.0
      %1054 = vmatpush1.msra.mxu0 0.0
      %1055 = vmatprep.subr.mxu0 0.0
      %1056 = vmatpush1.msra.mxu0 0.0
      %1057 = vmatprep.subr.mxu0 0.0
      %1058 = vmatpush1.msra.mxu0 0.0
      %1059 = vmatprep.subr.mxu0 0.0
      %1060 = vmatpush1.msra.mxu0 0.0
      %1061 = vmatprep.subr.mxu0 0.0
      %1062 = vmatpush1.msra.mxu0 0.0
      %1063 = vmatprep.subr.mxu0 0.0
      %1064 = vmatpush1.msra.mxu0 0.0
      %1065 = vmatprep.subr.mxu0 0.0
      %1066 = vmatpush1.msra.mxu0 0.0
      %1067 = vmatprep.subr.mxu0 0.0
      %1068 = vmatpush1.msra.mxu0 0.0
      %1069 = vmatprep.subr.mxu0 0.0
      %1070 = vmatpush1.msra.mxu0 0.0
      %1071 = vmatprep.subr.mxu0 0.0
      %1072 = vmatpush1.msra.mxu0 0.0
      %1073 = vmatprep.subr.mxu0 0.0
      %1074 = vmatpush1.msra.mxu0 0.0
      %1075 = vmatprep.mubr.f32.mxu0 0.0
      %v1076 = vand.u32 %v618, 4294901760
      %1077 = vmatmul.mubr.f32.gmra.mrb[0].mxu0 %v1076
      %v1078 = vpop.f32.mrb[0].mxu0
      %v1079 = vadd.f32 %v984, %v1078
      %v1080 = vpop.f32.mrb[0].mxu0
      %1081 = vdwg.mxu0
      %1082 = vmatprep.subr.mxu0 0.0
      %v1083 = vand.u32 %v601, 4294901760
      %1084 = vmatpush1.msra.mxu0 %v1083
      %1085 = vmatprep.subr.mxu0 0.0
      %v1086 = vand.u32 %v602, 4294901760
      %1087 = vmatpush1.msra.mxu0 %v1086
      %1088 = vmatprep.subr.mxu0 0.0
      %v1089 = vand.u32 %v603, 4294901760
      %1090 = vmatpush1.msra.mxu0 %v1089
      %1091 = vmatprep.subr.mxu0 0.0
      %v1092 = vand.u32 %v604, 4294901760
      %1093 = vmatpush1.msra.mxu0 %v1092
      %1094 = vmatprep.subr.mxu0 0.0
      %v1095 = vand.u32 %v605, 4294901760
      %1096 = vmatpush1.msra.mxu0 %v1095
      %1097 = vmatprep.subr.mxu0 0.0
      %v1098 = vand.u32 %v606, 4294901760
      %1099 = vmatpush1.msra.mxu0 %v1098
      %1100 = vmatprep.subr.mxu0 0.0
      %v1101 = vand.u32 %v607, 4294901760
      %1102 = vmatpush1.msra.mxu0 %v1101
      %1103 = vmatprep.subr.mxu0 0.0
      %v1104 = vand.u32 %v622, 4294901760
      %1105 = vmatpush1.msra.mxu0 %v1104
      %1106 = vmatprep.subr.mxu0 0.0
      %1107 = vmatpush1.msra.mxu0 0.0
      %1108 = vmatprep.subr.mxu0 0.0
      %1109 = vmatpush1.msra.mxu0 0.0
      %1110 = vmatprep.subr.mxu0 0.0
      %1111 = vmatpush1.msra.mxu0 0.0
      %1112 = vmatprep.subr.mxu0 0.0
      %1113 = vmatpush1.msra.mxu0 0.0
      %1114 = vmatprep.subr.mxu0 0.0
      %1115 = vmatpush1.msra.mxu0 0.0
      %1116 = vmatprep.subr.mxu0 0.0
      %1117 = vmatpush1.msra.mxu0 0.0
      %1118 = vmatprep.subr.mxu0 0.0
      %1119 = vmatpush1.msra.mxu0 0.0
      %1120 = vmatprep.subr.mxu0 0.0
      %1121 = vmatpush1.msra.mxu0 0.0
      %1122 = vmatprep.subr.mxu0 0.0
      %1123 = vmatpush1.msra.mxu0 0.0
      %1124 = vmatprep.subr.mxu0 0.0
      %1125 = vmatpush1.msra.mxu0 0.0
      %1126 = vmatprep.subr.mxu0 0.0
      %1127 = vmatpush1.msra.mxu0 0.0
      %1128 = vmatprep.subr.mxu0 0.0
      %1129 = vmatpush1.msra.mxu0 0.0
      %1130 = vmatprep.subr.mxu0 0.0
      %1131 = vmatpush1.msra.mxu0 0.0
      %1132 = vmatprep.subr.mxu0 0.0
      %1133 = vmatpush1.msra.mxu0 0.0
      %1134 = vmatprep.subr.mxu0 0.0
      %1135 = vmatpush1.msra.mxu0 0.0
      %1136 = vmatprep.subr.mxu0 0.0
      %1137 = vmatpush1.msra.mxu0 0.0
      %1138 = vmatprep.subr.mxu0 0.0
      %1139 = vmatpush1.msra.mxu0 0.0
      %1140 = vmatprep.subr.mxu0 0.0
      %1141 = vmatpush1.msra.mxu0 0.0
      %1142 = vmatprep.subr.mxu0 0.0
      %1143 = vmatpush1.msra.mxu0 0.0
      %1144 = vmatprep.subr.mxu0 0.0
      %1145 = vmatpush1.msra.mxu0 0.0
      %1146 = vmatprep.subr.mxu0 0.0
      %1147 = vmatpush1.msra.mxu0 0.0
      %1148 = vmatprep.subr.mxu0 0.0
      %1149 = vmatpush1.msra.mxu0 0.0
      %1150 = vmatprep.subr.mxu0 0.0
      %1151 = vmatpush1.msra.mxu0 0.0
      %1152 = vmatprep.subr.mxu0 0.0
      %1153 = vmatpush1.msra.mxu0 0.0
      %1154 = vmatprep.mubr.f32.mxu0 0.0
      %v1155 = vand.u32 %v618, 4294901760
      %1156 = vmatmul.mubr.f32.gmra.mrb[0].mxu0 %v1155
      %v1157 = vpop.f32.mrb[0].mxu0
      %v1158 = vadd.f32 %v1079, %v1157
      %v1159 = vpop.f32.mrb[0].mxu0
      %1160 = vdwg.mxu0
      %v1161 = vmul.f32 %v1158, 0.5
      %v1162 = vmul.f32 %v1158, 0.70710677
      %v1163 = verf.f32.pop %v1162
      %v1164 = vadd.f32 %v1163, 1.0
      %v1165 = vmul.f32 %v1161, %v1164
      %v1166 = vld [vmem:[%s4] sm:$0xff]
      %v1167 = vld [vmem:[%s4 + $0x8] sm:$0xff]
      %v1168 = vld [vmem:[%s4 + $0x10] sm:$0xff]
      %v1169 = vld [vmem:[%s4 + $0x18] sm:$0xff]
      %v1170 = vld [vmem:[%s4 + $0x20] sm:$0xff]
      %v1171 = vld [vmem:[%s4 + $0x28] sm:$0xff]
      %v1172 = vld [vmem:[%s4 + $0x30] sm:$0xff]
      %v1173 = vld [vmem:[%s4 + $0x38] sm:$0xff]
      %v1174 = vld [vmem:[%s5] sm:$0x1]
      %v1176 = vlaneseq
      %v1177 = vshrl.u32 %v1176, 7
      %v1178 = vsub.s32 0, %v1177
      %v1179 = vrot.slane %v1174, %v1178
      %vm1181 = vcmask 523264
      %v1183 = vsel %vm1181, %v1165, 0
      %1185 = vmatprep.subr.mxu0 0.0
      %v1186 = vand.u32 %v1166, 4294901760
      %1187 = vmatpush1.msra.mxu0 %v1186
      %1188 = vmatprep.subr.mxu0 0.0
      %v1189 = vand.u32 %v1167, 4294901760
      %1190 = vmatpush1.msra.mxu0 %v1189
      %1191 = vmatprep.subr.mxu0 0.0
      %v1192 = vand.u32 %v1168, 4294901760
      %1193 = vmatpush1.msra.mxu0 %v1192
      %1194 = vmatprep.subr.mxu0 0.0
      %v1195 = vand.u32 %v1169, 4294901760
      %1196 = vmatpush1.msra.mxu0 %v1195
      %1197 = vmatprep.subr.mxu0 0.0
      %v1198 = vand.u32 %v1170, 4294901760
      %1199 = vmatpush1.msra.mxu0 %v1198
      %1200 = vmatprep.subr.mxu0 0.0
      %v1201 = vand.u32 %v1171, 4294901760
      %1202 = vmatpush1.msra.mxu0 %v1201
      %1203 = vmatprep.subr.mxu0 0.0
      %v1204 = vand.u32 %v1172, 4294901760
      %1205 = vmatpush1.msra.mxu0 %v1204
      %1206 = vmatprep.subr.mxu0 0.0
      %v1207 = vand.u32 %v1173, 4294901760
      %1208 = vmatpush1.msra.mxu0 %v1207
      %1209 = vmatprep.subr.mxu0 0.0
      %1210 = vmatpush1.msra.mxu0 0.0
      %1211 = vmatprep.subr.mxu0 0.0
      %1212 = vmatpush1.msra.mxu0 0.0
      %1213 = vmatprep.subr.mxu0 0.0
      %1214 = vmatpush1.msra.mxu0 0.0
      %1215 = vmatprep.subr.mxu0 0.0
      %1216 = vmatpush1.msra.mxu0 0.0
      %1217 = vmatprep.subr.mxu0 0.0
      %1218 = vmatpush1.msra.mxu0 0.0
      %1219 = vmatprep.subr.mxu0 0.0
      %1220 = vmatpush1.msra.mxu0 0.0
      %1221 = vmatprep.subr.mxu0 0.0
      %1222 = vmatpush1.msra.mxu0 0.0
      %1223 = vmatprep.subr.mxu0 0.0
      %1224 = vmatpush1.msra.mxu0 0.0
      %1225 = vmatprep.subr.mxu0 0.0
      %1226 = vmatpush1.msra.mxu0 0.0
      %1227 = vmatprep.subr.mxu0 0.0
      %1228 = vmatpush1.msra.mxu0 0.0
      %1229 = vmatprep.subr.mxu0 0.0
      %1230 = vmatpush1.msra.mxu0 0.0
      %1231 = vmatprep.subr.mxu0 0.0
      %1232 = vmatpush1.msra.mxu0 0.0
      %1233 = vmatprep.subr.mxu0 0.0
      %1234 = vmatpush1.msra.mxu0 0.0
      %1235 = vmatprep.subr.mxu0 0.0
      %1236 = vmatpush1.msra.mxu0 0.0
      %1237 = vmatprep.subr.mxu0 0.0
      %1238 = vmatpush1.msra.mxu0 0.0
      %1239 = vmatprep.subr.mxu0 0.0
      %1240 = vmatpush1.msra.mxu0 0.0
      %1241 = vmatprep.subr.mxu0 0.0
      %1242 = vmatpush1.msra.mxu0 0.0
      %1243 = vmatprep.subr.mxu0 0.0
      %1244 = vmatpush1.msra.mxu0 0.0
      %1245 = vmatprep.subr.mxu0 0.0
      %1246 = vmatpush1.msra.mxu0 0.0
      %1247 = vmatprep.subr.mxu0 0.0
      %1248 = vmatpush1.msra.mxu0 0.0
      %1249 = vmatprep.subr.mxu0 0.0
      %1250 = vmatpush1.msra.mxu0 0.0
      %1251 = vmatprep.subr.mxu0 0.0
      %1252 = vmatpush1.msra.mxu0 0.0
      %1253 = vmatprep.subr.mxu0 0.0
      %1254 = vmatpush1.msra.mxu0 0.0
      %1255 = vmatprep.subr.mxu0 0.0
      %1256 = vmatpush1.msra.mxu0 0.0
      %1257 = vmatprep.mubr.f32.mxu0 0.0
      %v1258 = vand.u32 %v1183, 4294901760
      %v1259 = vsub.f32 %v1183, %v1258
      %v1260 = vand.u32 %v1259, 4294901760
      %v1261 = vsub.f32 %v1259, %v1260
      %v1262 = vand.u32 %v1261, 4294901760
      %1263 = vmatmul.mubr.f32.gmra.mrb[0].mxu0 %v1262
      %v1264 = vpop.f32.mrb[0].mxu0
      %v1265 = vadd.f32 %v1179, %v1264
      %v1266 = vpop.f32.mrb[0].mxu0
      %1267 = vdwg.mxu0
      %1268 = vmatprep.subr.mxu0 0.0
      %v1269 = vand.u32 %v1166, 4294901760
      %v1270 = vsub.f32 %v1166, %v1269
      %v1271 = vand.u32 %v1270, 4294901760
      %v1272 = vsub.f32 %v1270, %v1271
      %v1273 = vand.u32 %v1272, 4294901760
      %1274 = vmatpush1.msra.mxu0 %v1273
      %1275 = vmatprep.subr.mxu0 0.0
      %v1276 = vand.u32 %v1167, 4294901760
      %v1277 = vsub.f32 %v1167, %v1276
      %v1278 = vand.u32 %v1277, 4294901760
      %v1279 = vsub.f32 %v1277, %v1278
      %v1280 = vand.u32 %v1279, 4294901760
      %1281 = vmatpush1.msra.mxu0 %v1280
      %1282 = vmatprep.subr.mxu0 0.0
      %v1283 = vand.u32 %v1168, 4294901760
      %v1284 = vsub.f32 %v1168, %v1283
      %v1285 = vand.u32 %v1284, 4294901760
      %v1286 = vsub.f32 %v1284, %v1285
      %v1287 = vand.u32 %v1286, 4294901760
      %1288 = vmatpush1.msra.mxu0 %v1287
      %1289 = vmatprep.subr.mxu0 0.0
      %v1290 = vand.u32 %v1169, 4294901760
      %v1291 = vsub.f32 %v1169, %v1290
      %v1292 = vand.u32 %v1291, 4294901760
      %v1293 = vsub.f32 %v1291, %v1292
      %v1294 = vand.u32 %v1293, 4294901760
      %1295 = vmatpush1.msra.mxu0 %v1294
      %1296 = vmatprep.subr.mxu0 0.0
      %v1297 = vand.u32 %v1170, 4294901760
      %v1298 = vsub.f32 %v1170, %v1297
      %v1299 = vand.u32 %v1298, 4294901760
      %v1300 = vsub.f32 %v1298, %v1299
      %v1301 = vand.u32 %v1300, 4294901760
      %1302 = vmatpush1.msra.mxu0 %v1301
      %1303 = vmatprep.subr.mxu0 0.0
      %v1304 = vand.u32 %v1171, 4294901760
      %v1305 = vsub.f32 %v1171, %v1304
      %v1306 = vand.u32 %v1305, 4294901760
      %v1307 = vsub.f32 %v1305, %v1306
      %v1308 = vand.u32 %v1307, 4294901760
      %1309 = vmatpush1.msra.mxu0 %v1308
      %1310 = vmatprep.subr.mxu0 0.0
      %v1311 = vand.u32 %v1172, 4294901760
      %v1312 = vsub.f32 %v1172, %v1311
      %v1313 = vand.u32 %v1312, 4294901760
      %v1314 = vsub.f32 %v1312, %v1313
      %v1315 = vand.u32 %v1314, 4294901760
      %1316 = vmatpush1.msra.mxu0 %v1315
      %1317 = vmatprep.subr.mxu0 0.0
      %v1318 = vand.u32 %v1173, 4294901760
      %v1319 = vsub.f32 %v1173, %v1318
      %v1320 = vand.u32 %v1319, 4294901760
      %v1321 = vsub.f32 %v1319, %v1320
      %v1322 = vand.u32 %v1321, 4294901760
      %1323 = vmatpush1.msra.mxu0 %v1322
      %1324 = vmatprep.subr.mxu0 0.0
      %1325 = vmatpush1.msra.mxu0 0.0
      %1326 = vmatprep.subr.mxu0 0.0
      %1327 = vmatpush1.msra.mxu0 0.0
      %1328 = vmatprep.subr.mxu0 0.0
      %1329 = vmatpush1.msra.mxu0 0.0
      %1330 = vmatprep.subr.mxu0 0.0
      %1331 = vmatpush1.msra.mxu0 0.0
      %1332 = vmatprep.subr.mxu0 0.0
      %1333 = vmatpush1.msra.mxu0 0.0
      %1334 = vmatprep.subr.mxu0 0.0
      %1335 = vmatpush1.msra.mxu0 0.0
      %1336 = vmatprep.subr.mxu0 0.0
      %1337 = vmatpush1.msra.mxu0 0.0
      %1338 = vmatprep.subr.mxu0 0.0
      %1339 = vmatpush1.msra.mxu0 0.0
      %1340 = vmatprep.subr.mxu0 0.0
      %1341 = vmatpush1.msra.mxu0 0.0
      %1342 = vmatprep.subr.mxu0 0.0
      %1343 = vmatpush1.msra.mxu0 0.0
      %1344 = vmatprep.subr.mxu0 0.0
      %1345 = vmatpush1.msra.mxu0 0.0
      %1346 = vmatprep.subr.mxu0 0.0
      %1347 = vmatpush1.msra.mxu0 0.0
      %1348 = vmatprep.subr.mxu0 0.0
      %1349 = vmatpush1.msra.mxu0 0.0
      %1350 = vmatprep.subr.mxu0 0.0
      %1351 = vmatpush1.msra.mxu0 0.0
      %1352 = vmatprep.subr.mxu0 0.0
      %1353 = vmatpush1.msra.mxu0 0.0
      %1354 = vmatprep.subr.mxu0 0.0
      %1355 = vmatpush1.msra.mxu0 0.0
      %1356 = vmatprep.subr.mxu0 0.0
      %1357 = vmatpush1.msra.mxu0 0.0
      %1358 = vmatprep.subr.mxu0 0.0
      %1359 = vmatpush1.msra.mxu0 0.0
      %1360 = vmatprep.subr.mxu0 0.0
      %1361 = vmatpush1.msra.mxu0 0.0
      %1362 = vmatprep.subr.mxu0 0.0
      %1363 = vmatpush1.msra.mxu0 0.0
      %1364 = vmatprep.subr.mxu0 0.0
      %1365 = vmatpush1.msra.mxu0 0.0
      %1366 = vmatprep.subr.mxu0 0.0
      %1367 = vmatpush1.msra.mxu0 0.0
      %1368 = vmatprep.subr.mxu0 0.0
      %1369 = vmatpush1.msra.mxu0 0.0
      %1370 = vmatprep.subr.mxu0 0.0
      %1371 = vmatpush1.msra.mxu0 0.0
      %1372 = vmatprep.mubr.f32.mxu0 0.0
      %v1373 = vand.u32 %v1183, 4294901760
      %1374 = vmatmul.mubr.f32.gmra.mrb[0].mxu0 %v1373
      %v1375 = vpop.f32.mrb[0].mxu0
      %v1376 = vadd.f32 %v1265, %v1375
      %v1377 = vpop.f32.mrb[0].mxu0
      %1378 = vdwg.mxu0
      %1379 = vmatprep.subr.mxu0 0.0
      %v1380 = vand.u32 %v1166, 4294901760
      %v1381 = vsub.f32 %v1166, %v1380
      %1382 = vmatpush1.msra.mxu0 %v1381
      %1383 = vmatprep.subr.mxu0 0.0
      %v1384 = vand.u32 %v1167, 4294901760
      %v1385 = vsub.f32 %v1167, %v1384
      %1386 = vmatpush1.msra.mxu0 %v1385
      %1387 = vmatprep.subr.mxu0 0.0
      %v1388 = vand.u32 %v1168, 4294901760
      %v1389 = vsub.f32 %v1168, %v1388
      %1390 = vmatpush1.msra.mxu0 %v1389
      %1391 = vmatprep.subr.mxu0 0.0
      %v1392 = vand.u32 %v1169, 4294901760
      %v1393 = vsub.f32 %v1169, %v1392
      %1394 = vmatpush1.msra.mxu0 %v1393
      %1395 = vmatprep.subr.mxu0 0.0
      %v1396 = vand.u32 %v1170, 4294901760
      %v1397 = vsub.f32 %v1170, %v1396
      %1398 = vmatpush1.msra.mxu0 %v1397
      %1399 = vmatprep.subr.mxu0 0.0
      %v1400 = vand.u32 %v1171, 4294901760
      %v1401 = vsub.f32 %v1171, %v1400
      %1402 = vmatpush1.msra.mxu0 %v1401
      %1403 = vmatprep.subr.mxu0 0.0
      %v1404 = vand.u32 %v1172, 4294901760
      %v1405 = vsub.f32 %v1172, %v1404
      %1406 = vmatpush1.msra.mxu0 %v1405
      %1407 = vmatprep.subr.mxu0 0.0
      %v1408 = vand.u32 %v1173, 4294901760
      %v1409 = vsub.f32 %v1173, %v1408
      %1410 = vmatpush1.msra.mxu0 %v1409
      %1411 = vmatprep.subr.mxu0 0.0
      %1412 = vmatpush1.msra.mxu0 0.0
      %1413 = vmatprep.subr.mxu0 0.0
      %1414 = vmatpush1.msra.mxu0 0.0
      %1415 = vmatprep.subr.mxu0 0.0
      %1416 = vmatpush1.msra.mxu0 0.0
      %1417 = vmatprep.subr.mxu0 0.0
      %1418 = vmatpush1.msra.mxu0 0.0
      %1419 = vmatprep.subr.mxu0 0.0
      %1420 = vmatpush1.msra.mxu0 0.0
      %1421 = vmatprep.subr.mxu0 0.0
      %1422 = vmatpush1.msra.mxu0 0.0
      %1423 = vmatprep.subr.mxu0 0.0
      %1424 = vmatpush1.msra.mxu0 0.0
      %1425 = vmatprep.subr.mxu0 0.0
      %1426 = vmatpush1.msra.mxu0 0.0
      %1427 = vmatprep.subr.mxu0 0.0
      %1428 = vmatpush1.msra.mxu0 0.0
      %1429 = vmatprep.subr.mxu0 0.0
      %1430 = vmatpush1.msra.mxu0 0.0
      %1431 = vmatprep.subr.mxu0 0.0
      %1432 = vmatpush1.msra.mxu0 0.0
      %1433 = vmatprep.subr.mxu0 0.0
      %1434 = vmatpush1.msra.mxu0 0.0
      %1435 = vmatprep.subr.mxu0 0.0
      %1436 = vmatpush1.msra.mxu0 0.0
      %1437 = vmatprep.subr.mxu0 0.0
      %1438 = vmatpush1.msra.mxu0 0.0
      %1439 = vmatprep.subr.mxu0 0.0
      %1440 = vmatpush1.msra.mxu0 0.0
      %1441 = vmatprep.subr.mxu0 0.0
      %1442 = vmatpush1.msra.mxu0 0.0
      %1443 = vmatprep.subr.mxu0 0.0
      %1444 = vmatpush1.msra.mxu0 0.0
      %1445 = vmatprep.subr.mxu0 0.0
      %1446 = vmatpush1.msra.mxu0 0.0
      %1447 = vmatprep.subr.mxu0 0.0
      %1448 = vmatpush1.msra.mxu0 0.0
      %1449 = vmatprep.subr.mxu0 0.0
      %1450 = vmatpush1.msra.mxu0 0.0
      %1451 = vmatprep.subr.mxu0 0.0
      %1452 = vmatpush1.msra.mxu0 0.0
      %1453 = vmatprep.subr.mxu0 0.0
      %1454 = vmatpush1.msra.mxu0 0.0
      %1455 = vmatprep.subr.mxu0 0.0
      %1456 = vmatpush1.msra.mxu0 0.0
      %1457 = vmatprep.subr.mxu0 0.0
      %1458 = vmatpush1.msra.mxu0 0.0
      %1459 = vmatprep.mubr.f32.mxu0 0.0
      %v1460 = vand.u32 %v1183, 4294901760
      %v1461 = vsub.f32 %v1183, %v1460
      %1462 = vmatmul.mubr.f32.gmra.mrb[0].mxu0 %v1461
      %v1463 = vpop.f32.mrb[0].mxu0
      %v1464 = vadd.f32 %v1376, %v1463
      %v1465 = vpop.f32.mrb[0].mxu0
      %1466 = vdwg.mxu0
      %1467 = vmatprep.subr.mxu0 0.0
      %v1468 = vand.u32 %v1166, 4294901760
      %1469 = vmatpush1.msra.mxu0 %v1468
      %1470 = vmatprep.subr.mxu0 0.0
      %v1471 = vand.u32 %v1167, 4294901760
      %1472 = vmatpush1.msra.mxu0 %v1471
      %1473 = vmatprep.subr.mxu0 0.0
      %v1474 = vand.u32 %v1168, 4294901760
      %1475 = vmatpush1.msra.mxu0 %v1474
      %1476 = vmatprep.subr.mxu0 0.0
      %v1477 = vand.u32 %v1169, 4294901760
      %1478 = vmatpush1.msra.mxu0 %v1477
      %1479 = vmatprep.subr.mxu0 0.0
      %v1480 = vand.u32 %v1170, 4294901760
      %1481 = vmatpush1.msra.mxu0 %v1480
      %1482 = vmatprep.subr.mxu0 0.0
      %v1483 = vand.u32 %v1171, 4294901760
      %1484 = vmatpush1.msra.mxu0 %v1483
      %1485 = vmatprep.subr.mxu0 0.0
      %v1486 = vand.u32 %v1172, 4294901760
      %1487 = vmatpush1.msra.mxu0 %v1486
      %1488 = vmatprep.subr.mxu0 0.0
      %v1489 = vand.u32 %v1173, 4294901760
      %1490 = vmatpush1.msra.mxu0 %v1489
      %1491 = vmatprep.subr.mxu0 0.0
      %1492 = vmatpush1.msra.mxu0 0.0
      %1493 = vmatprep.subr.mxu0 0.0
      %1494 = vmatpush1.msra.mxu0 0.0
      %1495 = vmatprep.subr.mxu0 0.0
      %1496 = vmatpush1.msra.mxu0 0.0
      %1497 = vmatprep.subr.mxu0 0.0
      %1498 = vmatpush1.msra.mxu0 0.0
      %1499 = vmatprep.subr.mxu0 0.0
      %1500 = vmatpush1.msra.mxu0 0.0
      %1501 = vmatprep.subr.mxu0 0.0
      %1502 = vmatpush1.msra.mxu0 0.0
      %1503 = vmatprep.subr.mxu0 0.0
      %1504 = vmatpush1.msra.mxu0 0.0
      %1505 = vmatprep.subr.mxu0 0.0
      %1506 = vmatpush1.msra.mxu0 0.0
      %1507 = vmatprep.subr.mxu0 0.0
      %1508 = vmatpush1.msra.mxu0 0.0
      %1509 = vmatprep.subr.mxu0 0.0
      %1510 = vmatpush1.msra.mxu0 0.0
      %1511 = vmatprep.subr.mxu0 0.0
      %1512 = vmatpush1.msra.mxu0 0.0
      %1513 = vmatprep.subr.mxu0 0.0
      %1514 = vmatpush1.msra.mxu0 0.0
      %1515 = vmatprep.subr.mxu0 0.0
      %1516 = vmatpush1.msra.mxu0 0.0
      %1517 = vmatprep.subr.mxu0 0.0
      %1518 = vmatpush1.msra.mxu0 0.0
      %1519 = vmatprep.subr.mxu0 0.0
      %1520 = vmatpush1.msra.mxu0 0.0
      %1521 = vmatprep.subr.mxu0 0.0
      %1522 = vmatpush1.msra.mxu0 0.0
      %1523 = vmatprep.subr.mxu0 0.0
      %1524 = vmatpush1.msra.mxu0 0.0
      %1525 = vmatprep.subr.mxu0 0.0
      %1526 = vmatpush1.msra.mxu0 0.0
      %1527 = vmatprep.subr.mxu0 0.0
      %1528 = vmatpush1.msra.mxu0 0.0
      %1529 = vmatprep.subr.mxu0 0.0
      %1530 = vmatpush1.msra.mxu0 0.0
      %1531 = vmatprep.subr.mxu0 0.0
      %1532 = vmatpush1.msra.mxu0 0.0
      %1533 = vmatprep.subr.mxu0 0.0
      %1534 = vmatpush1.msra.mxu0 0.0
      %1535 = vmatprep.subr.mxu0 0.0
      %1536 = vmatpush1.msra.mxu0 0.0
      %1537 = vmatprep.subr.mxu0 0.0
      %1538 = vmatpush1.msra.mxu0 0.0
      %1539 = vmatprep.mubr.f32.mxu0 0.0
      %v1540 = vand.u32 %v1183, 4294901760
      %v1541 = vsub.f32 %v1183, %v1540
      %v1542 = vand.u32 %v1541, 4294901760
      %1543 = vmatmul.mubr.f32.gmra.mrb[0].mxu0 %v1542
      %v1544 = vpop.f32.mrb[0].mxu0
      %v1545 = vadd.f32 %v1464, %v1544
      %v1546 = vpop.f32.mrb[0].mxu0
      %1547 = vdwg.mxu0
      %1548 = vmatprep.subr.mxu0 0.0
      %v1549 = vand.u32 %v1166, 4294901760
      %v1550 = vsub.f32 %v1166, %v1549
      %v1551 = vand.u32 %v1550, 4294901760
      %1552 = vmatpush1.msra.mxu0 %v1551
      %1553 = vmatprep.subr.mxu0 0.0
      %v1554 = vand.u32 %v1167, 4294901760
      %v1555 = vsub.f32 %v1167, %v1554
      %v1556 = vand.u32 %v1555, 4294901760
      %1557 = vmatpush1.msra.mxu0 %v1556
      %1558 = vmatprep.subr.mxu0 0.0
      %v1559 = vand.u32 %v1168, 4294901760
      %v1560 = vsub.f32 %v1168, %v1559
      %v1561 = vand.u32 %v1560, 4294901760
      %1562 = vmatpush1.msra.mxu0 %v1561
      %1563 = vmatprep.subr.mxu0 0.0
      %v1564 = vand.u32 %v1169, 4294901760
      %v1565 = vsub.f32 %v1169, %v1564
      %v1566 = vand.u32 %v1565, 4294901760
      %1567 = vmatpush1.msra.mxu0 %v1566
      %1568 = vmatprep.subr.mxu0 0.0
      %v1569 = vand.u32 %v1170, 4294901760
      %v1570 = vsub.f32 %v1170, %v1569
      %v1571 = vand.u32 %v1570, 4294901760
      %1572 = vmatpush1.msra.mxu0 %v1571
      %1573 = vmatprep.subr.mxu0 0.0
      %v1574 = vand.u32 %v1171, 4294901760
      %v1575 = vsub.f32 %v1171, %v1574
      %v1576 = vand.u32 %v1575, 4294901760
      %1577 = vmatpush1.msra.mxu0 %v1576
      %1578 = vmatprep.subr.mxu0 0.0
      %v1579 = vand.u32 %v1172, 4294901760
      %v1580 = vsub.f32 %v1172, %v1579
      %v1581 = vand.u32 %v1580, 4294901760
      %1582 = vmatpush1.msra.mxu0 %v1581
      %1583 = vmatprep.subr.mxu0 0.0
      %v1584 = vand.u32 %v1173, 4294901760
      %v1585 = vsub.f32 %v1173, %v1584
      %v1586 = vand.u32 %v1585, 4294901760
      %1587 = vmatpush1.msra.mxu0 %v1586
      %1588 = vmatprep.subr.mxu0 0.0
      %1589 = vmatpush1.msra.mxu0 0.0
      %1590 = vmatprep.subr.mxu0 0.0
      %1591 = vmatpush1.msra.mxu0 0.0
      %1592 = vmatprep.subr.mxu0 0.0
      %1593 = vmatpush1.msra.mxu0 0.0
      %1594 = vmatprep.subr.mxu0 0.0
      %1595 = vmatpush1.msra.mxu0 0.0
      %1596 = vmatprep.subr.mxu0 0.0
      %1597 = vmatpush1.msra.mxu0 0.0
      %1598 = vmatprep.subr.mxu0 0.0
      %1599 = vmatpush1.msra.mxu0 0.0
      %1600 = vmatprep.subr.mxu0 0.0
      %1601 = vmatpush1.msra.mxu0 0.0
      %1602 = vmatprep.subr.mxu0 0.0
      %1603 = vmatpush1.msra.mxu0 0.0
      %1604 = vmatprep.subr.mxu0 0.0
      %1605 = vmatpush1.msra.mxu0 0.0
      %1606 = vmatprep.subr.mxu0 0.0
      %1607 = vmatpush1.msra.mxu0 0.0
      %1608 = vmatprep.subr.mxu0 0.0
      %1609 = vmatpush1.msra.mxu0 0.0
      %1610 = vmatprep.subr.mxu0 0.0
      %1611 = vmatpush1.msra.mxu0 0.0
      %1612 = vmatprep.subr.mxu0 0.0
      %1613 = vmatpush1.msra.mxu0 0.0
      %1614 = vmatprep.subr.mxu0 0.0
      %1615 = vmatpush1.msra.mxu0 0.0
      %1616 = vmatprep.subr.mxu0 0.0
      %1617 = vmatpush1.msra.mxu0 0.0
      %1618 = vmatprep.subr.mxu0 0.0
      %1619 = vmatpush1.msra.mxu0 0.0
      %1620 = vmatprep.subr.mxu0 0.0
      %1621 = vmatpush1.msra.mxu0 0.0
      %1622 = vmatprep.subr.mxu0 0.0
      %1623 = vmatpush1.msra.mxu0 0.0
      %1624 = vmatprep.subr.mxu0 0.0
      %1625 = vmatpush1.msra.mxu0 0.0
      %1626 = vmatprep.subr.mxu0 0.0
      %1627 = vmatpush1.msra.mxu0 0.0
      %1628 = vmatprep.subr.mxu0 0.0
      %1629 = vmatpush1.msra.mxu0 0.0
      %1630 = vmatprep.subr.mxu0 0.0
      %1631 = vmatpush1.msra.mxu0 0.0
      %1632 = vmatprep.subr.mxu0 0.0
      %1633 = vmatpush1.msra.mxu0 0.0
      %1634 = vmatprep.subr.mxu0 0.0
      %1635 = vmatpush1.msra.mxu0 0.0
      %1636 = vmatprep.mubr.f32.mxu0 0.0
      %v1637 = vand.u32 %v1183, 4294901760
      %1638 = vmatmul.mubr.f32.gmra.mrb[0].mxu0 %v1637
      %v1639 = vpop.f32.mrb[0].mxu0
      %v1640 = vadd.f32 %v1545, %v1639
      %v1641 = vpop.f32.mrb[0].mxu0
      %1642 = vdwg.mxu0
      %1643 = vmatprep.subr.mxu0 0.0
      %v1644 = vand.u32 %v1166, 4294901760
      %1645 = vmatpush1.msra.mxu0 %v1644
      %1646 = vmatprep.subr.mxu0 0.0
      %v1647 = vand.u32 %v1167, 4294901760
      %1648 = vmatpush1.msra.mxu0 %v1647
      %1649 = vmatprep.subr.mxu0 0.0
      %v1650 = vand.u32 %v1168, 4294901760
      %1651 = vmatpush1.msra.mxu0 %v1650
      %1652 = vmatprep.subr.mxu0 0.0
      %v1653 = vand.u32 %v1169, 4294901760
      %1654 = vmatpush1.msra.mxu0 %v1653
      %1655 = vmatprep.subr.mxu0 0.0
      %v1656 = vand.u32 %v1170, 4294901760
      %1657 = vmatpush1.msra.mxu0 %v1656
      %1658 = vmatprep.subr.mxu0 0.0
      %v1659 = vand.u32 %v1171, 4294901760
      %1660 = vmatpush1.msra.mxu0 %v1659
      %1661 = vmatprep.subr.mxu0 0.0
      %v1662 = vand.u32 %v1172, 4294901760
      %1663 = vmatpush1.msra.mxu0 %v1662
      %1664 = vmatprep.subr.mxu0 0.0
      %v1665 = vand.u32 %v1173, 4294901760
      %1666 = vmatpush1.msra.mxu0 %v1665
      %1667 = vmatprep.subr.mxu0 0.0
      %1668 = vmatpush1.msra.mxu0 0.0
      %1669 = vmatprep.subr.mxu0 0.0
      %1670 = vmatpush1.msra.mxu0 0.0
      %1671 = vmatprep.subr.mxu0 0.0
      %1672 = vmatpush1.msra.mxu0 0.0
      %1673 = vmatprep.subr.mxu0 0.0
      %1674 = vmatpush1.msra.mxu0 0.0
      %1675 = vmatprep.subr.mxu0 0.0
      %1676 = vmatpush1.msra.mxu0 0.0
      %1677 = vmatprep.subr.mxu0 0.0
      %1678 = vmatpush1.msra.mxu0 0.0
      %1679 = vmatprep.subr.mxu0 0.0
      %1680 = vmatpush1.msra.mxu0 0.0
      %1681 = vmatprep.subr.mxu0 0.0
      %1682 = vmatpush1.msra.mxu0 0.0
      %1683 = vmatprep.subr.mxu0 0.0
      %1684 = vmatpush1.msra.mxu0 0.0
      %1685 = vmatprep.subr.mxu0 0.0
      %1686 = vmatpush1.msra.mxu0 0.0
      %1687 = vmatprep.subr.mxu0 0.0
      %1688 = vmatpush1.msra.mxu0 0.0
      %1689 = vmatprep.subr.mxu0 0.0
      %1690 = vmatpush1.msra.mxu0 0.0
      %1691 = vmatprep.subr.mxu0 0.0
      %1692 = vmatpush1.msra.mxu0 0.0
      %1693 = vmatprep.subr.mxu0 0.0
      %1694 = vmatpush1.msra.mxu0 0.0
      %1695 = vmatprep.subr.mxu0 0.0
      %1696 = vmatpush1.msra.mxu0 0.0
      %1697 = vmatprep.subr.mxu0 0.0
      %1698 = vmatpush1.msra.mxu0 0.0
      %1699 = vmatprep.subr.mxu0 0.0
      %1700 = vmatpush1.msra.mxu0 0.0
      %1701 = vmatprep.subr.mxu0 0.0
      %1702 = vmatpush1.msra.mxu0 0.0
      %1703 = vmatprep.subr.mxu0 0.0
      %1704 = vmatpush1.msra.mxu0 0.0
      %1705 = vmatprep.subr.mxu0 0.0
      %1706 = vmatpush1.msra.mxu0 0.0
      %1707 = vmatprep.subr.mxu0 0.0
      %1708 = vmatpush1.msra.mxu0 0.0
      %1709 = vmatprep.subr.mxu0 0.0
      %1710 = vmatpush1.msra.mxu0 0.0
      %1711 = vmatprep.subr.mxu0 0.0
      %1712 = vmatpush1.msra.mxu0 0.0
      %1713 = vmatprep.subr.mxu0 0.0
      %1714 = vmatpush1.msra.mxu0 0.0
      %1715 = vmatprep.mubr.f32.mxu0 0.0
      %v1716 = vand.u32 %v1183, 4294901760
      %1717 = vmatmul.mubr.f32.gmra.mrb[0].mxu0 %v1716
      %v1718 = vpop.f32.mrb[0].mxu0
      %v1719 = vadd.f32 %v1640, %v1718
      %v1720 = vpop.f32.mrb[0].mxu0
      %1721 = vdwg.mxu0
      %v1722 = vmul.f32 %v1719, 0.5
      %v1723 = vmul.f32 %v1719, 0.70710677
      %v1724 = verf.f32.pop %v1723
      %v1725 = vadd.f32 %v1724, 1.0
      %v1726 = vmul.f32 %v1722, %v1725
      %v1727 = vld [vmem:[%s6] sm:$0xff]
      %v1728 = vld [vmem:[%s6 + $0x8] sm:$0xff]
      %v1729 = vld [vmem:[%s6 + $0x10] sm:$0xff]
      %v1730 = vld [vmem:[%s6 + $0x18] sm:$0xff]
      %v1731 = vld [vmem:[%s6 + $0x20] sm:$0xff]
      %v1732 = vld [vmem:[%s6 + $0x28] sm:$0xff]
      %v1733 = vld [vmem:[%s6 + $0x30] sm:$0xff]
      %v1734 = vld [vmem:[%s6 + $0x38] sm:$0xff]
      %v1735 = vld [vmem:[%s7] sm:$0x1]
      %v1737 = vlaneseq
      %v1738 = vshrl.u32 %v1737, 7
      %v1739 = vsub.s32 0, %v1738
      %v1740 = vrot.slane %v1735, %v1739
      %v1743 = vsel %vm1181, %v1726, 0
      %1745 = vmatprep.subr.mxu0 0.0
      %v1746 = vand.u32 %v1727, 4294901760
      %1747 = vmatpush1.msra.mxu0 %v1746
      %1748 = vmatprep.subr.mxu0 0.0
      %v1749 = vand.u32 %v1728, 4294901760
      %1750 = vmatpush1.msra.mxu0 %v1749
      %1751 = vmatprep.subr.mxu0 0.0
      %v1752 = vand.u32 %v1729, 4294901760
      %1753 = vmatpush1.msra.mxu0 %v1752
      %1754 = vmatprep.subr.mxu0 0.0
      %v1755 = vand.u32 %v1730, 4294901760
      %1756 = vmatpush1.msra.mxu0 %v1755
      %1757 = vmatprep.subr.mxu0 0.0
      %v1758 = vand.u32 %v1731, 4294901760
      %1759 = vmatpush1.msra.mxu0 %v1758
      %1760 = vmatprep.subr.mxu0 0.0
      %v1761 = vand.u32 %v1732, 4294901760
      %1762 = vmatpush1.msra.mxu0 %v1761
      %1763 = vmatprep.subr.mxu0 0.0
      %v1764 = vand.u32 %v1733, 4294901760
      %1765 = vmatpush1.msra.mxu0 %v1764
      %1766 = vmatprep.subr.mxu0 0.0
      %v1767 = vand.u32 %v1734, 4294901760
      %1768 = vmatpush1.msra.mxu0 %v1767
      %1769 = vmatprep.subr.mxu0 0.0
      %1770 = vmatpush1.msra.mxu0 0.0
      %1771 = vmatprep.subr.mxu0 0.0
      %1772 = vmatpush1.msra.mxu0 0.0
      %1773 = vmatprep.subr.mxu0 0.0
      %1774 = vmatpush1.msra.mxu0 0.0
      %1775 = vmatprep.subr.mxu0 0.0
      %1776 = vmatpush1.msra.mxu0 0.0
      %1777 = vmatprep.subr.mxu0 0.0
      %1778 = vmatpush1.msra.mxu0 0.0
      %1779 = vmatprep.subr.mxu0 0.0
      %1780 = vmatpush1.msra.mxu0 0.0
      %1781 = vmatprep.subr.mxu0 0.0
      %1782 = vmatpush1.msra.mxu0 0.0
      %1783 = vmatprep.subr.mxu0 0.0
      %1784 = vmatpush1.msra.mxu0 0.0
      %1785 = vmatprep.subr.mxu0 0.0
      %1786 = vmatpush1.msra.mxu0 0.0
      %1787 = vmatprep.subr.mxu0 0.0
      %1788 = vmatpush1.msra.mxu0 0.0
      %1789 = vmatprep.subr.mxu0 0.0
      %1790 = vmatpush1.msra.mxu0 0.0
      %1791 = vmatprep.subr.mxu0 0.0
      %1792 = vmatpush1.msra.mxu0 0.0
      %1793 = vmatprep.subr.mxu0 0.0
      %1794 = vmatpush1.msra.mxu0 0.0
      %1795 = vmatprep.subr.mxu0 0.0
      %1796 = vmatpush1.msra.mxu0 0.0
      %1797 = vmatprep.subr.mxu0 0.0
      %1798 = vmatpush1.msra.mxu0 0.0
      %1799 = vmatprep.subr.mxu0 0.0
      %1800 = vmatpush1.msra.mxu0 0.0
      %1801 = vmatprep.subr.mxu0 0.0
      %1802 = vmatpush1.msra.mxu0 0.0
      %1803 = vmatprep.subr.mxu0 0.0
      %1804 = vmatpush1.msra.mxu0 0.0
      %1805 = vmatprep.subr.mxu0 0.0
      %1806 = vmatpush1.msra.mxu0 0.0
      %1807 = vmatprep.subr.mxu0 0.0
      %1808 = vmatpush1.msra.mxu0 0.0
      %1809 = vmatprep.subr.mxu0 0.0
      %1810 = vmatpush1.msra.mxu0 0.0
      %1811 = vmatprep.subr.mxu0 0.0
      %1812 = vmatpush1.msra.mxu0 0.0
      %1813 = vmatprep.subr.mxu0 0.0
      %1814 = vmatpush1.msra.mxu0 0.0
      %1815 = vmatprep.subr.mxu0 0.0
      %1816 = vmatpush1.msra.mxu0 0.0
      %1817 = vmatprep.mubr.f32.mxu0 0.0
      %v1818 = vand.u32 %v1743, 4294901760
      %v1819 = vsub.f32 %v1743, %v1818
      %v1820 = vand.u32 %v1819, 4294901760
      %v1821 = vsub.f32 %v1819, %v1820
      %v1822 = vand.u32 %v1821, 4294901760
      %1823 = vmatmul.mubr.f32.gmra.mrb[0].mxu0 %v1822
      %v1824 = vpop.f32.mrb[0].mxu0
      %v1825 = vadd.f32 %v1740, %v1824
      %v1826 = vpop.f32.mrb[0].mxu0
      %1827 = vdwg.mxu0
      %1828 = vmatprep.subr.mxu0 0.0
      %v1829 = vand.u32 %v1727, 4294901760
      %v1830 = vsub.f32 %v1727, %v1829
      %v1831 = vand.u32 %v1830, 4294901760
      %v1832 = vsub.f32 %v1830, %v1831
      %v1833 = vand.u32 %v1832, 4294901760
      %1834 = vmatpush1.msra.mxu0 %v1833
      %1835 = vmatprep.subr.mxu0 0.0
      %v1836 = vand.u32 %v1728, 4294901760
      %v1837 = vsub.f32 %v1728, %v1836
      %v1838 = vand.u32 %v1837, 4294901760
      %v1839 = vsub.f32 %v1837, %v1838
      %v1840 = vand.u32 %v1839, 4294901760
      %1841 = vmatpush1.msra.mxu0 %v1840
      %1842 = vmatprep.subr.mxu0 0.0
      %v1843 = vand.u32 %v1729, 4294901760
      %v1844 = vsub.f32 %v1729, %v1843
      %v1845 = vand.u32 %v1844, 4294901760
      %v1846 = vsub.f32 %v1844, %v1845
      %v1847 = vand.u32 %v1846, 4294901760
      %1848 = vmatpush1.msra.mxu0 %v1847
      %1849 = vmatprep.subr.mxu0 0.0
      %v1850 = vand.u32 %v1730, 4294901760
      %v1851 = vsub.f32 %v1730, %v1850
      %v1852 = vand.u32 %v1851, 4294901760
      %v1853 = vsub.f32 %v1851, %v1852
      %v1854 = vand.u32 %v1853, 4294901760
      %1855 = vmatpush1.msra.mxu0 %v1854
      %1856 = vmatprep.subr.mxu0 0.0
      %v1857 = vand.u32 %v1731, 4294901760
      %v1858 = vsub.f32 %v1731, %v1857
      %v1859 = vand.u32 %v1858, 4294901760
      %v1860 = vsub.f32 %v1858, %v1859
      %v1861 = vand.u32 %v1860, 4294901760
      %1862 = vmatpush1.msra.mxu0 %v1861
      %1863 = vmatprep.subr.mxu0 0.0
      %v1864 = vand.u32 %v1732, 4294901760
      %v1865 = vsub.f32 %v1732, %v1864
      %v1866 = vand.u32 %v1865, 4294901760
      %v1867 = vsub.f32 %v1865, %v1866
      %v1868 = vand.u32 %v1867, 4294901760
      %1869 = vmatpush1.msra.mxu0 %v1868
      %1870 = vmatprep.subr.mxu0 0.0
      %v1871 = vand.u32 %v1733, 4294901760
      %v1872 = vsub.f32 %v1733, %v1871
      %v1873 = vand.u32 %v1872, 4294901760
      %v1874 = vsub.f32 %v1872, %v1873
      %v1875 = vand.u32 %v1874, 4294901760
      %1876 = vmatpush1.msra.mxu0 %v1875
      %1877 = vmatprep.subr.mxu0 0.0
      %v1878 = vand.u32 %v1734, 4294901760
      %v1879 = vsub.f32 %v1734, %v1878
      %v1880 = vand.u32 %v1879, 4294901760
      %v1881 = vsub.f32 %v1879, %v1880
      %v1882 = vand.u32 %v1881, 4294901760
      %1883 = vmatpush1.msra.mxu0 %v1882
      %1884 = vmatprep.subr.mxu0 0.0
      %1885 = vmatpush1.msra.mxu0 0.0
      %1886 = vmatprep.subr.mxu0 0.0
      %1887 = vmatpush1.msra.mxu0 0.0
      %1888 = vmatprep.subr.mxu0 0.0
      %1889 = vmatpush1.msra.mxu0 0.0
      %1890 = vmatprep.subr.mxu0 0.0
      %1891 = vmatpush1.msra.mxu0 0.0
      %1892 = vmatprep.subr.mxu0 0.0
      %1893 = vmatpush1.msra.mxu0 0.0
      %1894 = vmatprep.subr.mxu0 0.0
      %1895 = vmatpush1.msra.mxu0 0.0
      %1896 = vmatprep.subr.mxu0 0.0
      %1897 = vmatpush1.msra.mxu0 0.0
      %1898 = vmatprep.subr.mxu0 0.0
      %1899 = vmatpush1.msra.mxu0 0.0
      %1900 = vmatprep.subr.mxu0 0.0
      %1901 = vmatpush1.msra.mxu0 0.0
      %1902 = vmatprep.subr.mxu0 0.0
      %1903 = vmatpush1.msra.mxu0 0.0
      %1904 = vmatprep.subr.mxu0 0.0
      %1905 = vmatpush1.msra.mxu0 0.0
      %1906 = vmatprep.subr.mxu0 0.0
      %1907 = vmatpush1.msra.mxu0 0.0
      %1908 = vmatprep.subr.mxu0 0.0
      %1909 = vmatpush1.msra.mxu0 0.0
      %1910 = vmatprep.subr.mxu0 0.0
      %1911 = vmatpush1.msra.mxu0 0.0
      %1912 = vmatprep.subr.mxu0 0.0
      %1913 = vmatpush1.msra.mxu0 0.0
      %1914 = vmatprep.subr.mxu0 0.0
      %1915 = vmatpush1.msra.mxu0 0.0
      %1916 = vmatprep.subr.mxu0 0.0
      %1917 = vmatpush1.msra.mxu0 0.0
      %1918 = vmatprep.subr.mxu0 0.0
      %1919 = vmatpush1.msra.mxu0 0.0
      %1920 = vmatprep.subr.mxu0 0.0
      %1921 = vmatpush1.msra.mxu0 0.0
      %1922 = vmatprep.subr.mxu0 0.0
      %1923 = vmatpush1.msra.mxu0 0.0
      %1924 = vmatprep.subr.mxu0 0.0
      %1925 = vmatpush1.msra.mxu0 0.0
      %1926 = vmatprep.subr.mxu0 0.0
      %1927 = vmatpush1.msra.mxu0 0.0
      %1928 = vmatprep.subr.mxu0 0.0
      %1929 = vmatpush1.msra.mxu0 0.0
      %1930 = vmatprep.subr.mxu0 0.0
      %1931 = vmatpush1.msra.mxu0 0.0
      %1932 = vmatprep.mubr.f32.mxu0 0.0
      %v1933 = vand.u32 %v1743, 4294901760
      %1934 = vmatmul.mubr.f32.gmra.mrb[0].mxu0 %v1933
      %v1935 = vpop.f32.mrb[0].mxu0
      %v1936 = vadd.f32 %v1825, %v1935
      %v1937 = vpop.f32.mrb[0].mxu0
      %1938 = vdwg.mxu0
      %1939 = vmatprep.subr.mxu0 0.0
      %v1940 = vand.u32 %v1727, 4294901760
      %v1941 = vsub.f32 %v1727, %v1940
      %1942 = vmatpush1.msra.mxu0 %v1941
      %1943 = vmatprep.subr.mxu0 0.0
      %v1944 = vand.u32 %v1728, 4294901760
      %v1945 = vsub.f32 %v1728, %v1944
      %1946 = vmatpush1.msra.mxu0 %v1945
      %1947 = vmatprep.subr.mxu0 0.0
      %v1948 = vand.u32 %v1729, 4294901760
      %v1949 = vsub.f32 %v1729, %v1948
      %1950 = vmatpush1.msra.mxu0 %v1949
      %1951 = vmatprep.subr.mxu0 0.0
      %v1952 = vand.u32 %v1730, 4294901760
      %v1953 = vsub.f32 %v1730, %v1952
      %1954 = vmatpush1.msra.mxu0 %v1953
      %1955 = vmatprep.subr.mxu0 0.0
      %v1956 = vand.u32 %v1731, 4294901760
      %v1957 = vsub.f32 %v1731, %v1956
      %1958 = vmatpush1.msra.mxu0 %v1957
      %1959 = vmatprep.subr.mxu0 0.0
      %v1960 = vand.u32 %v1732, 4294901760
      %v1961 = vsub.f32 %v1732, %v1960
      %1962 = vmatpush1.msra.mxu0 %v1961
      %1963 = vmatprep.subr.mxu0 0.0
      %v1964 = vand.u32 %v1733, 4294901760
      %v1965 = vsub.f32 %v1733, %v1964
      %1966 = vmatpush1.msra.mxu0 %v1965
      %1967 = vmatprep.subr.mxu0 0.0
      %v1968 = vand.u32 %v1734, 4294901760
      %v1969 = vsub.f32 %v1734, %v1968
      %1970 = vmatpush1.msra.mxu0 %v1969
      %1971 = vmatprep.subr.mxu0 0.0
      %1972 = vmatpush1.msra.mxu0 0.0
      %1973 = vmatprep.subr.mxu0 0.0
      %1974 = vmatpush1.msra.mxu0 0.0
      %1975 = vmatprep.subr.mxu0 0.0
      %1976 = vmatpush1.msra.mxu0 0.0
      %1977 = vmatprep.subr.mxu0 0.0
      %1978 = vmatpush1.msra.mxu0 0.0
      %1979 = vmatprep.subr.mxu0 0.0
      %1980 = vmatpush1.msra.mxu0 0.0
      %1981 = vmatprep.subr.mxu0 0.0
      %1982 = vmatpush1.msra.mxu0 0.0
      %1983 = vmatprep.subr.mxu0 0.0
      %1984 = vmatpush1.msra.mxu0 0.0
      %1985 = vmatprep.subr.mxu0 0.0
      %1986 = vmatpush1.msra.mxu0 0.0
      %1987 = vmatprep.subr.mxu0 0.0
      %1988 = vmatpush1.msra.mxu0 0.0
      %1989 = vmatprep.subr.mxu0 0.0
      %1990 = vmatpush1.msra.mxu0 0.0
      %1991 = vmatprep.subr.mxu0 0.0
      %1992 = vmatpush1.msra.mxu0 0.0
      %1993 = vmatprep.subr.mxu0 0.0
      %1994 = vmatpush1.msra.mxu0 0.0
      %1995 = vmatprep.subr.mxu0 0.0
      %1996 = vmatpush1.msra.mxu0 0.0
      %1997 = vmatprep.subr.mxu0 0.0
      %1998 = vmatpush1.msra.mxu0 0.0
      %1999 = vmatprep.subr.mxu0 0.0
      %2000 = vmatpush1.msra.mxu0 0.0
      %2001 = vmatprep.subr.mxu0 0.0
      %2002 = vmatpush1.msra.mxu0 0.0
      %2003 = vmatprep.subr.mxu0 0.0
      %2004 = vmatpush1.msra.mxu0 0.0
      %2005 = vmatprep.subr.mxu0 0.0
      %2006 = vmatpush1.msra.mxu0 0.0
      %2007 = vmatprep.subr.mxu0 0.0
      %2008 = vmatpush1.msra.mxu0 0.0
      %2009 = vmatprep.subr.mxu0 0.0
      %2010 = vmatpush1.msra.mxu0 0.0
      %2011 = vmatprep.subr.mxu0 0.0
      %2012 = vmatpush1.msra.mxu0 0.0
      %2013 = vmatprep.subr.mxu0 0.0
      %2014 = vmatpush1.msra.mxu0 0.0
      %2015 = vmatprep.subr.mxu0 0.0
      %2016 = vmatpush1.msra.mxu0 0.0
      %2017 = vmatprep.subr.mxu0 0.0
      %2018 = vmatpush1.msra.mxu0 0.0
      %2019 = vmatprep.mubr.f32.mxu0 0.0
      %v2020 = vand.u32 %v1743, 4294901760
      %v2021 = vsub.f32 %v1743, %v2020
      %2022 = vmatmul.mubr.f32.gmra.mrb[0].mxu0 %v2021
      %v2023 = vpop.f32.mrb[0].mxu0
      %v2024 = vadd.f32 %v1936, %v2023
      %v2025 = vpop.f32.mrb[0].mxu0
      %2026 = vdwg.mxu0
      %2027 = vmatprep.subr.mxu0 0.0
      %v2028 = vand.u32 %v1727, 4294901760
      %2029 = vmatpush1.msra.mxu0 %v2028
      %2030 = vmatprep.subr.mxu0 0.0
      %v2031 = vand.u32 %v1728, 4294901760
      %2032 = vmatpush1.msra.mxu0 %v2031
      %2033 = vmatprep.subr.mxu0 0.0
      %v2034 = vand.u32 %v1729, 4294901760
      %2035 = vmatpush1.msra.mxu0 %v2034
      %2036 = vmatprep.subr.mxu0 0.0
      %v2037 = vand.u32 %v1730, 4294901760
      %2038 = vmatpush1.msra.mxu0 %v2037
      %2039 = vmatprep.subr.mxu0 0.0
      %v2040 = vand.u32 %v1731, 4294901760
      %2041 = vmatpush1.msra.mxu0 %v2040
      %2042 = vmatprep.subr.mxu0 0.0
      %v2043 = vand.u32 %v1732, 4294901760
      %2044 = vmatpush1.msra.mxu0 %v2043
      %2045 = vmatprep.subr.mxu0 0.0
      %v2046 = vand.u32 %v1733, 4294901760
      %2047 = vmatpush1.msra.mxu0 %v2046
      %2048 = vmatprep.subr.mxu0 0.0
      %v2049 = vand.u32 %v1734, 4294901760
      %2050 = vmatpush1.msra.mxu0 %v2049
      %2051 = vmatprep.subr.mxu0 0.0
      %2052 = vmatpush1.msra.mxu0 0.0
      %2053 = vmatprep.subr.mxu0 0.0
      %2054 = vmatpush1.msra.mxu0 0.0
      %2055 = vmatprep.subr.mxu0 0.0
      %2056 = vmatpush1.msra.mxu0 0.0
      %2057 = vmatprep.subr.mxu0 0.0
      %2058 = vmatpush1.msra.mxu0 0.0
      %2059 = vmatprep.subr.mxu0 0.0
      %2060 = vmatpush1.msra.mxu0 0.0
      %2061 = vmatprep.subr.mxu0 0.0
      %2062 = vmatpush1.msra.mxu0 0.0
      %2063 = vmatprep.subr.mxu0 0.0
      %2064 = vmatpush1.msra.mxu0 0.0
      %2065 = vmatprep.subr.mxu0 0.0
      %2066 = vmatpush1.msra.mxu0 0.0
      %2067 = vmatprep.subr.mxu0 0.0
      %2068 = vmatpush1.msra.mxu0 0.0
      %2069 = vmatprep.subr.mxu0 0.0
      %2070 = vmatpush1.msra.mxu0 0.0
      %2071 = vmatprep.subr.mxu0 0.0
      %2072 = vmatpush1.msra.mxu0 0.0
      %2073 = vmatprep.subr.mxu0 0.0
      %2074 = vmatpush1.msra.mxu0 0.0
      %2075 = vmatprep.subr.mxu0 0.0
      %2076 = vmatpush1.msra.mxu0 0.0
      %2077 = vmatprep.subr.mxu0 0.0
      %2078 = vmatpush1.msra.mxu0 0.0
      %2079 = vmatprep.subr.mxu0 0.0
      %2080 = vmatpush1.msra.mxu0 0.0
      %2081 = vmatprep.subr.mxu0 0.0
      %2082 = vmatpush1.msra.mxu0 0.0
      %2083 = vmatprep.subr.mxu0 0.0
      %2084 = vmatpush1.msra.mxu0 0.0
      %2085 = vmatprep.subr.mxu0 0.0
      %2086 = vmatpush1.msra.mxu0 0.0
      %2087 = vmatprep.subr.mxu0 0.0
      %2088 = vmatpush1.msra.mxu0 0.0
      %2089 = vmatprep.subr.mxu0 0.0
      %2090 = vmatpush1.msra.mxu0 0.0
      %2091 = vmatprep.subr.mxu0 0.0
      %2092 = vmatpush1.msra.mxu0 0.0
      %2093 = vmatprep.subr.mxu0 0.0
      %2094 = vmatpush1.msra.mxu0 0.0
      %2095 = vmatprep.subr.mxu0 0.0
      %2096 = vmatpush1.msra.mxu0 0.0
      %2097 = vmatprep.subr.mxu0 0.0
      %2098 = vmatpush1.msra.mxu0 0.0
      %2099 = vmatprep.mubr.f32.mxu0 0.0
      %v2100 = vand.u32 %v1743, 4294901760
      %v2101 = vsub.f32 %v1743, %v2100
      %v2102 = vand.u32 %v2101, 4294901760
      %2103 = vmatmul.mubr.f32.gmra.mrb[0].mxu0 %v2102
      %v2104 = vpop.f32.mrb[0].mxu0
      %v2105 = vadd.f32 %v2024, %v2104
      %v2106 = vpop.f32.mrb[0].mxu0
      %2107 = vdwg.mxu0
      %2108 = vmatprep.subr.mxu0 0.0
      %v2109 = vand.u32 %v1727, 4294901760
      %v2110 = vsub.f32 %v1727, %v2109
      %v2111 = vand.u32 %v2110, 4294901760
      %2112 = vmatpush1.msra.mxu0 %v2111
      %2113 = vmatprep.subr.mxu0 0.0
      %v2114 = vand.u32 %v1728, 4294901760
      %v2115 = vsub.f32 %v1728, %v2114
      %v2116 = vand.u32 %v2115, 4294901760
      %2117 = vmatpush1.msra.mxu0 %v2116
      %2118 = vmatprep.subr.mxu0 0.0
      %v2119 = vand.u32 %v1729, 4294901760
      %v2120 = vsub.f32 %v1729, %v2119
      %v2121 = vand.u32 %v2120, 4294901760
      %2122 = vmatpush1.msra.mxu0 %v2121
      %2123 = vmatprep.subr.mxu0 0.0
      %v2124 = vand.u32 %v1730, 4294901760
      %v2125 = vsub.f32 %v1730, %v2124
      %v2126 = vand.u32 %v2125, 4294901760
      %2127 = vmatpush1.msra.mxu0 %v2126
      %2128 = vmatprep.subr.mxu0 0.0
      %v2129 = vand.u32 %v1731, 4294901760
      %v2130 = vsub.f32 %v1731, %v2129
      %v2131 = vand.u32 %v2130, 4294901760
      %2132 = vmatpush1.msra.mxu0 %v2131
      %2133 = vmatprep.subr.mxu0 0.0
      %v2134 = vand.u32 %v1732, 4294901760
      %v2135 = vsub.f32 %v1732, %v2134
      %v2136 = vand.u32 %v2135, 4294901760
      %2137 = vmatpush1.msra.mxu0 %v2136
      %2138 = vmatprep.subr.mxu0 0.0
      %v2139 = vand.u32 %v1733, 4294901760
      %v2140 = vsub.f32 %v1733, %v2139
      %v2141 = vand.u32 %v2140, 4294901760
      %2142 = vmatpush1.msra.mxu0 %v2141
      %2143 = vmatprep.subr.mxu0 0.0
      %v2144 = vand.u32 %v1734, 4294901760
      %v2145 = vsub.f32 %v1734, %v2144
      %v2146 = vand.u32 %v2145, 4294901760
      %2147 = vmatpush1.msra.mxu0 %v2146
      %2148 = vmatprep.subr.mxu0 0.0
      %2149 = vmatpush1.msra.mxu0 0.0
      %2150 = vmatprep.subr.mxu0 0.0
      %2151 = vmatpush1.msra.mxu0 0.0
      %2152 = vmatprep.subr.mxu0 0.0
      %2153 = vmatpush1.msra.mxu0 0.0
      %2154 = vmatprep.subr.mxu0 0.0
      %2155 = vmatpush1.msra.mxu0 0.0
      %2156 = vmatprep.subr.mxu0 0.0
      %2157 = vmatpush1.msra.mxu0 0.0
      %2158 = vmatprep.subr.mxu0 0.0
      %2159 = vmatpush1.msra.mxu0 0.0
      %2160 = vmatprep.subr.mxu0 0.0
      %2161 = vmatpush1.msra.mxu0 0.0
      %2162 = vmatprep.subr.mxu0 0.0
      %2163 = vmatpush1.msra.mxu0 0.0
      %2164 = vmatprep.subr.mxu0 0.0
      %2165 = vmatpush1.msra.mxu0 0.0
      %2166 = vmatprep.subr.mxu0 0.0
      %2167 = vmatpush1.msra.mxu0 0.0
      %2168 = vmatprep.subr.mxu0 0.0
      %2169 = vmatpush1.msra.mxu0 0.0
      %2170 = vmatprep.subr.mxu0 0.0
      %2171 = vmatpush1.msra.mxu0 0.0
      %2172 = vmatprep.subr.mxu0 0.0
      %2173 = vmatpush1.msra.mxu0 0.0
      %2174 = vmatprep.subr.mxu0 0.0
      %2175 = vmatpush1.msra.mxu0 0.0
      %2176 = vmatprep.subr.mxu0 0.0
      %2177 = vmatpush1.msra.mxu0 0.0
      %2178 = vmatprep.subr.mxu0 0.0
      %2179 = vmatpush1.msra.mxu0 0.0
      %2180 = vmatprep.subr.mxu0 0.0
      %2181 = vmatpush1.msra.mxu0 0.0
      %2182 = vmatprep.subr.mxu0 0.0
      %2183 = vmatpush1.msra.mxu0 0.0
      %2184 = vmatprep.subr.mxu0 0.0
      %2185 = vmatpush1.msra.mxu0 0.0
      %2186 = vmatprep.subr.mxu0 0.0
      %2187 = vmatpush1.msra.mxu0 0.0
      %2188 = vmatprep.subr.mxu0 0.0
      %2189 = vmatpush1.msra.mxu0 0.0
      %2190 = vmatprep.subr.mxu0 0.0
      %2191 = vmatpush1.msra.mxu0 0.0
      %2192 = vmatprep.subr.mxu0 0.0
      %2193 = vmatpush1.msra.mxu0 0.0
      %2194 = vmatprep.subr.mxu0 0.0
      %2195 = vmatpush1.msra.mxu0 0.0
      %2196 = vmatprep.mubr.f32.mxu0 0.0
      %v2197 = vand.u32 %v1743, 4294901760
      %2198 = vmatmul.mubr.f32.gmra.mrb[0].mxu0 %v2197
      %v2199 = vpop.f32.mrb[0].mxu0
      %v2200 = vadd.f32 %v2105, %v2199
      %v2201 = vpop.f32.mrb[0].mxu0
      %2202 = vdwg.mxu0
      %2203 = vmatprep.subr.mxu0 0.0
      %v2204 = vand.u32 %v1727, 4294901760
      %2205 = vmatpush1.msra.mxu0 %v2204
      %2206 = vmatprep.subr.mxu0 0.0
      %v2207 = vand.u32 %v1728, 4294901760
      %2208 = vmatpush1.msra.mxu0 %v2207
      %2209 = vmatprep.subr.mxu0 0.0
      %v2210 = vand.u32 %v1729, 4294901760
      %2211 = vmatpush1.msra.mxu0 %v2210
      %2212 = vmatprep.subr.mxu0 0.0
      %v2213 = vand.u32 %v1730, 4294901760
      %2214 = vmatpush1.msra.mxu0 %v2213
      %2215 = vmatprep.subr.mxu0 0.0
      %v2216 = vand.u32 %v1731, 4294901760
      %2217 = vmatpush1.msra.mxu0 %v2216
      %2218 = vmatprep.subr.mxu0 0.0
      %v2219 = vand.u32 %v1732, 4294901760
      %2220 = vmatpush1.msra.mxu0 %v2219
      %2221 = vmatprep.subr.mxu0 0.0
      %v2222 = vand.u32 %v1733, 4294901760
      %2223 = vmatpush1.msra.mxu0 %v2222
      %2224 = vmatprep.subr.mxu0 0.0
      %v2225 = vand.u32 %v1734, 4294901760
      %2226 = vmatpush1.msra.mxu0 %v2225
      %2227 = vmatprep.subr.mxu0 0.0
      %2228 = vmatpush1.msra.mxu0 0.0
      %2229 = vmatprep.subr.mxu0 0.0
      %2230 = vmatpush1.msra.mxu0 0.0
      %2231 = vmatprep.subr.mxu0 0.0
      %2232 = vmatpush1.msra.mxu0 0.0
      %2233 = vmatprep.subr.mxu0 0.0
      %2234 = vmatpush1.msra.mxu0 0.0
      %2235 = vmatprep.subr.mxu0 0.0
      %2236 = vmatpush1.msra.mxu0 0.0
      %2237 = vmatprep.subr.mxu0 0.0
      %2238 = vmatpush1.msra.mxu0 0.0
      %2239 = vmatprep.subr.mxu0 0.0
      %2240 = vmatpush1.msra.mxu0 0.0
      %2241 = vmatprep.subr.mxu0 0.0
      %2242 = vmatpush1.msra.mxu0 0.0
      %2243 = vmatprep.subr.mxu0 0.0
      %2244 = vmatpush1.msra.mxu0 0.0
      %2245 = vmatprep.subr.mxu0 0.0
      %2246 = vmatpush1.msra.mxu0 0.0
      %2247 = vmatprep.subr.mxu0 0.0
      %2248 = vmatpush1.msra.mxu0 0.0
      %2249 = vmatprep.subr.mxu0 0.0
      %2250 = vmatpush1.msra.mxu0 0.0
      %2251 = vmatprep.subr.mxu0 0.0
      %2252 = vmatpush1.msra.mxu0 0.0
      %2253 = vmatprep.subr.mxu0 0.0
      %2254 = vmatpush1.msra.mxu0 0.0
      %2255 = vmatprep.subr.mxu0 0.0
      %2256 = vmatpush1.msra.mxu0 0.0
      %2257 = vmatprep.subr.mxu0 0.0
      %2258 = vmatpush1.msra.mxu0 0.0
      %2259 = vmatprep.subr.mxu0 0.0
      %2260 = vmatpush1.msra.mxu0 0.0
      %2261 = vmatprep.subr.mxu0 0.0
      %2262 = vmatpush1.msra.mxu0 0.0
      %2263 = vmatprep.subr.mxu0 0.0
      %2264 = vmatpush1.msra.mxu0 0.0
      %2265 = vmatprep.subr.mxu0 0.0
      %2266 = vmatpush1.msra.mxu0 0.0
      %2267 = vmatprep.subr.mxu0 0.0
      %2268 = vmatpush1.msra.mxu0 0.0
      %2269 = vmatprep.subr.mxu0 0.0
      %2270 = vmatpush1.msra.mxu0 0.0
      %2271 = vmatprep.subr.mxu0 0.0
      %2272 = vmatpush1.msra.mxu0 0.0
      %2273 = vmatprep.subr.mxu0 0.0
      %2274 = vmatpush1.msra.mxu0 0.0
      %2275 = vmatprep.mubr.f32.mxu0 0.0
      %v2276 = vand.u32 %v1743, 4294901760
      %2277 = vmatmul.mubr.f32.gmra.mrb[0].mxu0 %v2276
      %v2278 = vpop.f32.mrb[0].mxu0
      %v2279 = vadd.f32 %v2200, %v2278
      %v2280 = vpop.f32.mrb[0].mxu0
      %2281 = vdwg.mxu0
      %v2282 = vmul.f32 %v2279, %v2279
      %v2283 = vsel %vm357, %v2282, 0.0
      %2284 = vadd.xlane.f32.xlu0 %v2283
      %v2285 = vpop.xlane.xlu0 %2284
      %v2286 = vmax.f32 %v2285, 1e-24
      %v2287 = vrsqrt.pop %v2286
      %v2288 = vmul.f32 %v2279, %v2287
      %2290 = vrot.lane.b32.xlu0 %v2279, 124
      %v2291 = vpop.permute.xlu0 %2290
      %v2293 = vmul.f32 %v2288, %v2291
      %2294 = vrot.lane.b32.xlu0 %v2279, 126
      %v2295 = vpop.permute.xlu0 %2294
      %v2297 = vmul.f32 %v2288, %v2295
      %2299 = vrot.lane.b32.xlu0 %v2297, 127
      %v2300 = vpop.permute.xlu0 %2299
      %v2302 = vsub.f32 %v2293, %v2300
      %2303 = vrot.lane.b32.xlu0 %v2279, 127
      %v2304 = vpop.permute.xlu0 %2303
      %v2306 = vmul.f32 %v2288, %v2304
      %2307 = vrot.lane.b32.xlu0 %v2279, 123
      %v2308 = vpop.permute.xlu0 %2307
      %v2310 = vmul.f32 %v2288, %v2308
      %2312 = vrot.lane.b32.xlu0 %v2310, 2
      %v2313 = vpop.permute.xlu0 %2312
      %v2315 = vsub.f32 %v2306, %v2313
      %2317 = vrot.lane.b32.xlu0 %v2302, 127
      %v2318 = vpop.permute.xlu0 %2317
      %2321 = vrot.lane.b32.xlu0 %v2315, 127
      %v2322 = vpop.permute.xlu0 %2321
      %2324 = vrot.lane.b32.xlu0 %v2302, 2
      %v2325 = vpop.permute.xlu0 %2324
      %vm2327 = vcmask 7168
      %v2328 = vsel %vm2327, %v2318, %v2322
      %vm2329 = vcmask 15360
      %v2330 = vsel %vm2329, %v2328, %v2325
      %v2331 = vmul.f32 %v2330, %v2330
      %v2332 = vsel %vm357, %v2331, 0.0
      %2333 = vadd.xlane.f32.xlu0 %v2332
      %v2334 = vpop.xlane.xlu0 %2333
      %v2335 = vmax.f32 %v2334, 1e-24
      %v2336 = vrsqrt.pop %v2335
      %v2337 = vmul.f32 %v2330, %v2336
      %2339 = vrot.lane.b32.xlu0 %v2288, 127
      %v2340 = vpop.permute.xlu0 %2339
      %v2342 = vmul.f32 %v2337, %v2340
      %2343 = vrot.lane.b32.xlu0 %v2288, 1
      %v2344 = vpop.permute.xlu0 %2343
      %v2346 = vmul.f32 %v2337, %v2344
      %2348 = vrot.lane.b32.xlu0 %v2346, 127
      %v2349 = vpop.permute.xlu0 %2348
      %v2351 = vsub.f32 %v2342, %v2349
      %2352 = vrot.lane.b32.xlu0 %v2288, 2
      %v2353 = vpop.permute.xlu0 %2352
      %v2355 = vmul.f32 %v2337, %v2353
      %2356 = vrot.lane.b32.xlu0 %v2288, 126
      %v2357 = vpop.permute.xlu0 %2356
      %v2359 = vmul.f32 %v2337, %v2357
      %2361 = vrot.lane.b32.xlu0 %v2359, 2
      %v2362 = vpop.permute.xlu0 %2361
      %v2364 = vsub.f32 %v2355, %v2362
      %2366 = vrot.lane.b32.xlu0 %v2351, 127
      %v2367 = vpop.permute.xlu0 %2366
      %2370 = vrot.lane.b32.xlu0 %v2364, 127
      %v2371 = vpop.permute.xlu0 %2370
      %2373 = vrot.lane.b32.xlu0 %v2351, 2
      %v2374 = vpop.permute.xlu0 %2373
      %v2376 = vsel %vm2327, %v2367, %v2371
      %v2377 = vsel %vm2329, %v2376, %v2374
      %2379 = vrot.lane.b32.xlu0 %v2377, 3
      %v2380 = vpop.permute.xlu0 %2379
      %2383 = vrot.lane.b32.xlu0 %v2337, 6
      %v2384 = vpop.permute.xlu0 %2383
      %2386 = vrot.lane.b32.xlu0 %v2279, 3
      %v2387 = vpop.permute.xlu0 %2386
      %v2389 = vsel %vm357, %v2288, %v2380
      %v2390 = vsel %vm359, %v2389, %v2384
      %v2391 = vsel %vm361, %v2390, %v2387
      %v2392 = vld [vmem:[%s8] sm:$0xff]
      %v2393 = vld [vmem:[%s8 + $0x8] sm:$0xf]
      %v2395 = vsel %vm363, %v2391, 0
      %vm2397 = vcmask 1043456
      %v2399 = vsel %vm2397, %v2393, 0
      %2401 = vmatprep.subr.mxu0 0.0
      %v2402 = vand.u32 %v2392, 4294901760
      %2403 = vmatpush1.msra.mxu0 %v2402
      %2404 = vmatprep.subr.mxu0 0.0
      %v2405 = vand.u32 %v2399, 4294901760
      %2406 = vmatpush1.msra.mxu0 %v2405
      %2407 = vmatprep.subr.mxu0 0.0
      %2408 = vmatpush1.msra.mxu0 0.0
      %2409 = vmatprep.subr.mxu0 0.0
      %2410 = vmatpush1.msra.mxu0 0.0
      %2411 = vmatprep.subr.mxu0 0.0
      %2412 = vmatpush1.msra.mxu0 0.0
      %2413 = vmatprep.subr.mxu0 0.0
      %2414 = vmatpush1.msra.mxu0 0.0
      %2415 = vmatprep.subr.mxu0 0.0
      %2416 = vmatpush1.msra.mxu0 0.0
      %2417 = vmatprep.subr.mxu0 0.0
      %2418 = vmatpush1.msra.mxu0 0.0
      %2419 = vmatprep.subr.mxu0 0.0
      %2420 = vmatpush1.msra.mxu0 0.0
      %2421 = vmatprep.subr.mxu0 0.0
      %2422 = vmatpush1.msra.mxu0 0.0
      %2423 = vmatprep.subr.mxu0 0.0
      %2424 = vmatpush1.msra.mxu0 0.0
      %2425 = vmatprep.subr.mxu0 0.0
      %2426 = vmatpush1.msra.mxu0 0.0
      %2427 = vmatprep.subr.mxu0 0.0
      %2428 = vmatpush1.msra.mxu0 0.0
      %2429 = vmatprep.subr.mxu0 0.0
      %2430 = vmatpush1.msra.mxu0 0.0
      %2431 = vmatprep.subr.mxu0 0.0
      %2432 = vmatpush1.msra.mxu0 0.0
      %2433 = vmatprep.subr.mxu0 0.0
      %2434 = vmatpush1.msra.mxu0 0.0
      %2435 = vmatprep.subr.mxu0 0.0
      %2436 = vmatpush1.msra.mxu0 0.0
      %2437 = vmatprep.subr.mxu0 0.0
      %2438 = vmatpush1.msra.mxu0 0.0
      %2439 = vmatprep.subr.mxu0 0.0
      %2440 = vmatpush1.msra.mxu0 0.0
      %2441 = vmatprep.subr.mxu0 0.0
      %2442 = vmatpush1.msra.mxu0 0.0
      %2443 = vmatprep.subr.mxu0 0.0
      %2444 = vmatpush1.msra.mxu0 0.0
      %2445 = vmatprep.subr.mxu0 0.0
      %2446 = vmatpush1.msra.mxu0 0.0
      %2447 = vmatprep.subr.mxu0 0.0
      %2448 = vmatpush1.msra.mxu0 0.0
      %2449 = vmatprep.subr.mxu0 0.0
      %2450 = vmatpush1.msra.mxu0 0.0
      %2451 = vmatprep.subr.mxu0 0.0
      %2452 = vmatpush1.msra.mxu0 0.0
      %2453 = vmatprep.subr.mxu0 0.0
      %2454 = vmatpush1.msra.mxu0 0.0
      %2455 = vmatprep.subr.mxu0 0.0
      %2456 = vmatpush1.msra.mxu0 0.0
      %2457 = vmatprep.subr.mxu0 0.0
      %2458 = vmatpush1.msra.mxu0 0.0
      %2459 = vmatprep.subr.mxu0 0.0
      %2460 = vmatpush1.msra.mxu0 0.0
      %2461 = vmatprep.subr.mxu0 0.0
      %2462 = vmatpush1.msra.mxu0 0.0
      %2463 = vmatprep.subr.mxu0 0.0
      %2464 = vmatpush1.msra.mxu0 0.0
      %2465 = vmatprep.subr.mxu0 0.0
      %2466 = vmatpush1.msra.mxu0 0.0
      %2467 = vmatprep.mubr.f32.mxu0 0.0
      %v2468 = vand.u32 %v2395, 4294901760
      %v2469 = vsub.f32 %v2395, %v2468
      %v2470 = vand.u32 %v2469, 4294901760
      %v2471 = vsub.f32 %v2469, %v2470
      %v2472 = vand.u32 %v2471, 4294901760
      %2473 = vmatmul.mubr.f32.gmra.mrb[0].mxu0 %v2472
      %v2474 = vpop.f32.mrb[0].mxu0
      %v2475 = vadd.f32 0.0, %v2474
      %v2476 = vpop.f32.mrb[0].mxu0
      %2477 = vdwg.mxu0
      %2478 = vmatprep.subr.mxu0 0.0
      %v2479 = vand.u32 %v2392, 4294901760
      %v2480 = vsub.f32 %v2392, %v2479
      %v2481 = vand.u32 %v2480, 4294901760
      %v2482 = vsub.f32 %v2480, %v2481
      %v2483 = vand.u32 %v2482, 4294901760
      %2484 = vmatpush1.msra.mxu0 %v2483
      %2485 = vmatprep.subr.mxu0 0.0
      %v2486 = vand.u32 %v2399, 4294901760
      %v2487 = vsub.f32 %v2399, %v2486
      %v2488 = vand.u32 %v2487, 4294901760
      %v2489 = vsub.f32 %v2487, %v2488
      %v2490 = vand.u32 %v2489, 4294901760
      %2491 = vmatpush1.msra.mxu0 %v2490
      %2492 = vmatprep.subr.mxu0 0.0
      %2493 = vmatpush1.msra.mxu0 0.0
      %2494 = vmatprep.subr.mxu0 0.0
      %2495 = vmatpush1.msra.mxu0 0.0
      %2496 = vmatprep.subr.mxu0 0.0
      %2497 = vmatpush1.msra.mxu0 0.0
      %2498 = vmatprep.subr.mxu0 0.0
      %2499 = vmatpush1.msra.mxu0 0.0
      %2500 = vmatprep.subr.mxu0 0.0
      %2501 = vmatpush1.msra.mxu0 0.0
      %2502 = vmatprep.subr.mxu0 0.0
      %2503 = vmatpush1.msra.mxu0 0.0
      %2504 = vmatprep.subr.mxu0 0.0
      %2505 = vmatpush1.msra.mxu0 0.0
      %2506 = vmatprep.subr.mxu0 0.0
      %2507 = vmatpush1.msra.mxu0 0.0
      %2508 = vmatprep.subr.mxu0 0.0
      %2509 = vmatpush1.msra.mxu0 0.0
      %2510 = vmatprep.subr.mxu0 0.0
      %2511 = vmatpush1.msra.mxu0 0.0
      %2512 = vmatprep.subr.mxu0 0.0
      %2513 = vmatpush1.msra.mxu0 0.0
      %2514 = vmatprep.subr.mxu0 0.0
      %2515 = vmatpush1.msra.mxu0 0.0
      %2516 = vmatprep.subr.mxu0 0.0
      %2517 = vmatpush1.msra.mxu0 0.0
      %2518 = vmatprep.subr.mxu0 0.0
      %2519 = vmatpush1.msra.mxu0 0.0
      %2520 = vmatprep.subr.mxu0 0.0
      %2521 = vmatpush1.msra.mxu0 0.0
      %2522 = vmatprep.subr.mxu0 0.0
      %2523 = vmatpush1.msra.mxu0 0.0
      %2524 = vmatprep.subr.mxu0 0.0
      %2525 = vmatpush1.msra.mxu0 0.0
      %2526 = vmatprep.subr.mxu0 0.0
      %2527 = vmatpush1.msra.mxu0 0.0
      %2528 = vmatprep.subr.mxu0 0.0
      %2529 = vmatpush1.msra.mxu0 0.0
      %2530 = vmatprep.subr.mxu0 0.0
      %2531 = vmatpush1.msra.mxu0 0.0
      %2532 = vmatprep.subr.mxu0 0.0
      %2533 = vmatpush1.msra.mxu0 0.0
      %2534 = vmatprep.subr.mxu0 0.0
      %2535 = vmatpush1.msra.mxu0 0.0
      %2536 = vmatprep.subr.mxu0 0.0
      %2537 = vmatpush1.msra.mxu0 0.0
      %2538 = vmatprep.subr.mxu0 0.0
      %2539 = vmatpush1.msra.mxu0 0.0
      %2540 = vmatprep.subr.mxu0 0.0
      %2541 = vmatpush1.msra.mxu0 0.0
      %2542 = vmatprep.subr.mxu0 0.0
      %2543 = vmatpush1.msra.mxu0 0.0
      %2544 = vmatprep.subr.mxu0 0.0
      %2545 = vmatpush1.msra.mxu0 0.0
      %2546 = vmatprep.subr.mxu0 0.0
      %2547 = vmatpush1.msra.mxu0 0.0
      %2548 = vmatprep.subr.mxu0 0.0
      %2549 = vmatpush1.msra.mxu0 0.0
      %2550 = vmatprep.subr.mxu0 0.0
      %2551 = vmatpush1.msra.mxu0 0.0
      %2552 = vmatprep.mubr.f32.mxu0 0.0
      %v2553 = vand.u32 %v2395, 4294901760
      %2554 = vmatmul.mubr.f32.gmra.mrb[0].mxu0 %v2553
      %v2555 = vpop.f32.mrb[0].mxu0
      %v2556 = vadd.f32 %v2475, %v2555
      %v2557 = vpop.f32.mrb[0].mxu0
      %2558 = vdwg.mxu0
      %2559 = vmatprep.subr.mxu0 0.0
      %v2560 = vand.u32 %v2392, 4294901760
      %v2561 = vsub.f32 %v2392, %v2560
      %2562 = vmatpush1.msra.mxu0 %v2561
      %2563 = vmatprep.subr.mxu0 0.0
      %v2564 = vand.u32 %v2399, 4294901760
      %v2565 = vsub.f32 %v2399, %v2564
      %2566 = vmatpush1.msra.mxu0 %v2565
      %2567 = vmatprep.subr.mxu0 0.0
      %2568 = vmatpush1.msra.mxu0 0.0
      %2569 = vmatprep.subr.mxu0 0.0
      %2570 = vmatpush1.msra.mxu0 0.0
      %2571 = vmatprep.subr.mxu0 0.0
      %2572 = vmatpush1.msra.mxu0 0.0
      %2573 = vmatprep.subr.mxu0 0.0
      %2574 = vmatpush1.msra.mxu0 0.0
      %2575 = vmatprep.subr.mxu0 0.0
      %2576 = vmatpush1.msra.mxu0 0.0
      %2577 = vmatprep.subr.mxu0 0.0
      %2578 = vmatpush1.msra.mxu0 0.0
      %2579 = vmatprep.subr.mxu0 0.0
      %2580 = vmatpush1.msra.mxu0 0.0
      %2581 = vmatprep.subr.mxu0 0.0
      %2582 = vmatpush1.msra.mxu0 0.0
      %2583 = vmatprep.subr.mxu0 0.0
      %2584 = vmatpush1.msra.mxu0 0.0
      %2585 = vmatprep.subr.mxu0 0.0
      %2586 = vmatpush1.msra.mxu0 0.0
      %2587 = vmatprep.subr.mxu0 0.0
      %2588 = vmatpush1.msra.mxu0 0.0
      %2589 = vmatprep.subr.mxu0 0.0
      %2590 = vmatpush1.msra.mxu0 0.0
      %2591 = vmatprep.subr.mxu0 0.0
      %2592 = vmatpush1.msra.mxu0 0.0
      %2593 = vmatprep.subr.mxu0 0.0
      %2594 = vmatpush1.msra.mxu0 0.0
      %2595 = vmatprep.subr.mxu0 0.0
      %2596 = vmatpush1.msra.mxu0 0.0
      %2597 = vmatprep.subr.mxu0 0.0
      %2598 = vmatpush1.msra.mxu0 0.0
      %2599 = vmatprep.subr.mxu0 0.0
      %2600 = vmatpush1.msra.mxu0 0.0
      %2601 = vmatprep.subr.mxu0 0.0
      %2602 = vmatpush1.msra.mxu0 0.0
      %2603 = vmatprep.subr.mxu0 0.0
      %2604 = vmatpush1.msra.mxu0 0.0
      %2605 = vmatprep.subr.mxu0 0.0
      %2606 = vmatpush1.msra.mxu0 0.0
      %2607 = vmatprep.subr.mxu0 0.0
      %2608 = vmatpush1.msra.mxu0 0.0
      %2609 = vmatprep.subr.mxu0 0.0
      %2610 = vmatpush1.msra.mxu0 0.0
      %2611 = vmatprep.subr.mxu0 0.0
      %2612 = vmatpush1.msra.mxu0 0.0
      %2613 = vmatprep.subr.mxu0 0.0
      %2614 = vmatpush1.msra.mxu0 0.0
      %2615 = vmatprep.subr.mxu0 0.0
      %2616 = vmatpush1.msra.mxu0 0.0
      %2617 = vmatprep.subr.mxu0 0.0
      %2618 = vmatpush1.msra.mxu0 0.0
      %2619 = vmatprep.subr.mxu0 0.0
      %2620 = vmatpush1.msra.mxu0 0.0
      %2621 = vmatprep.subr.mxu0 0.0
      %2622 = vmatpush1.msra.mxu0 0.0
      %2623 = vmatprep.subr.mxu0 0.0
      %2624 = vmatpush1.msra.mxu0 0.0
      %2625 = vmatprep.subr.mxu0 0.0
      %2626 = vmatpush1.msra.mxu0 0.0
      %2627 = vmatprep.mubr.f32.mxu0 0.0
      %v2628 = vand.u32 %v2395, 4294901760
      %v2629 = vsub.f32 %v2395, %v2628
      %2630 = vmatmul.mubr.f32.gmra.mrb[0].mxu0 %v2629
      %v2631 = vpop.f32.mrb[0].mxu0
      %v2632 = vadd.f32 %v2556, %v2631
      %v2633 = vpop.f32.mrb[0].mxu0
      %2634 = vdwg.mxu0
      %2635 = vmatprep.subr.mxu0 0.0
      %v2636 = vand.u32 %v2392, 4294901760
      %2637 = vmatpush1.msra.mxu0 %v2636
      %2638 = vmatprep.subr.mxu0 0.0
      %v2639 = vand.u32 %v2399, 4294901760
      %2640 = vmatpush1.msra.mxu0 %v2639
      %2641 = vmatprep.subr.mxu0 0.0
      %2642 = vmatpush1.msra.mxu0 0.0
      %2643 = vmatprep.subr.mxu0 0.0
      %2644 = vmatpush1.msra.mxu0 0.0
      %2645 = vmatprep.subr.mxu0 0.0
      %2646 = vmatpush1.msra.mxu0 0.0
      %2647 = vmatprep.subr.mxu0 0.0
      %2648 = vmatpush1.msra.mxu0 0.0
      %2649 = vmatprep.subr.mxu0 0.0
      %2650 = vmatpush1.msra.mxu0 0.0
      %2651 = vmatprep.subr.mxu0 0.0
      %2652 = vmatpush1.msra.mxu0 0.0
      %2653 = vmatprep.subr.mxu0 0.0
      %2654 = vmatpush1.msra.mxu0 0.0
      %2655 = vmatprep.subr.mxu0 0.0
      %2656 = vmatpush1.msra.mxu0 0.0
      %2657 = vmatprep.subr.mxu0 0.0
      %2658 = vmatpush1.msra.mxu0 0.0
      %2659 = vmatprep.subr.mxu0 0.0
      %2660 = vmatpush1.msra.mxu0 0.0
      %2661 = vmatprep.subr.mxu0 0.0
      %2662 = vmatpush1.msra.mxu0 0.0
      %2663 = vmatprep.subr.mxu0 0.0
      %2664 = vmatpush1.msra.mxu0 0.0
      %2665 = vmatprep.subr.mxu0 0.0
      %2666 = vmatpush1.msra.mxu0 0.0
      %2667 = vmatprep.subr.mxu0 0.0
      %2668 = vmatpush1.msra.mxu0 0.0
      %2669 = vmatprep.subr.mxu0 0.0
      %2670 = vmatpush1.msra.mxu0 0.0
      %2671 = vmatprep.subr.mxu0 0.0
      %2672 = vmatpush1.msra.mxu0 0.0
      %2673 = vmatprep.subr.mxu0 0.0
      %2674 = vmatpush1.msra.mxu0 0.0
      %2675 = vmatprep.subr.mxu0 0.0
      %2676 = vmatpush1.msra.mxu0 0.0
      %2677 = vmatprep.subr.mxu0 0.0
      %2678 = vmatpush1.msra.mxu0 0.0
      %2679 = vmatprep.subr.mxu0 0.0
      %2680 = vmatpush1.msra.mxu0 0.0
      %2681 = vmatprep.subr.mxu0 0.0
      %2682 = vmatpush1.msra.mxu0 0.0
      %2683 = vmatprep.subr.mxu0 0.0
      %2684 = vmatpush1.msra.mxu0 0.0
      %2685 = vmatprep.subr.mxu0 0.0
      %2686 = vmatpush1.msra.mxu0 0.0
      %2687 = vmatprep.subr.mxu0 0.0
      %2688 = vmatpush1.msra.mxu0 0.0
      %2689 = vmatprep.subr.mxu0 0.0
      %2690 = vmatpush1.msra.mxu0 0.0
      %2691 = vmatprep.subr.mxu0 0.0
      %2692 = vmatpush1.msra.mxu0 0.0
      %2693 = vmatprep.subr.mxu0 0.0
      %2694 = vmatpush1.msra.mxu0 0.0
      %2695 = vmatprep.subr.mxu0 0.0
      %2696 = vmatpush1.msra.mxu0 0.0
      %2697 = vmatprep.subr.mxu0 0.0
      %2698 = vmatpush1.msra.mxu0 0.0
      %2699 = vmatprep.subr.mxu0 0.0
      %2700 = vmatpush1.msra.mxu0 0.0
      %2701 = vmatprep.mubr.f32.mxu0 0.0
      %v2702 = vand.u32 %v2395, 4294901760
      %v2703 = vsub.f32 %v2395, %v2702
      %v2704 = vand.u32 %v2703, 4294901760
      %2705 = vmatmul.mubr.f32.gmra.mrb[0].mxu0 %v2704
      %v2706 = vpop.f32.mrb[0].mxu0
      %v2707 = vadd.f32 %v2632, %v2706
      %v2708 = vpop.f32.mrb[0].mxu0
      %2709 = vdwg.mxu0
      %2710 = vmatprep.subr.mxu0 0.0
      %v2711 = vand.u32 %v2392, 4294901760
      %v2712 = vsub.f32 %v2392, %v2711
      %v2713 = vand.u32 %v2712, 4294901760
      %2714 = vmatpush1.msra.mxu0 %v2713
      %2715 = vmatprep.subr.mxu0 0.0
      %v2716 = vand.u32 %v2399, 4294901760
      %v2717 = vsub.f32 %v2399, %v2716
      %v2718 = vand.u32 %v2717, 4294901760
      %2719 = vmatpush1.msra.mxu0 %v2718
      %2720 = vmatprep.subr.mxu0 0.0
      %2721 = vmatpush1.msra.mxu0 0.0
      %2722 = vmatprep.subr.mxu0 0.0
      %2723 = vmatpush1.msra.mxu0 0.0
      %2724 = vmatprep.subr.mxu0 0.0
      %2725 = vmatpush1.msra.mxu0 0.0
      %2726 = vmatprep.subr.mxu0 0.0
      %2727 = vmatpush1.msra.mxu0 0.0
      %2728 = vmatprep.subr.mxu0 0.0
      %2729 = vmatpush1.msra.mxu0 0.0
      %2730 = vmatprep.subr.mxu0 0.0
      %2731 = vmatpush1.msra.mxu0 0.0
      %2732 = vmatprep.subr.mxu0 0.0
      %2733 = vmatpush1.msra.mxu0 0.0
      %2734 = vmatprep.subr.mxu0 0.0
      %2735 = vmatpush1.msra.mxu0 0.0
      %2736 = vmatprep.subr.mxu0 0.0
      %2737 = vmatpush1.msra.mxu0 0.0
      %2738 = vmatprep.subr.mxu0 0.0
      %2739 = vmatpush1.msra.mxu0 0.0
      %2740 = vmatprep.subr.mxu0 0.0
      %2741 = vmatpush1.msra.mxu0 0.0
      %2742 = vmatprep.subr.mxu0 0.0
      %2743 = vmatpush1.msra.mxu0 0.0
      %2744 = vmatprep.subr.mxu0 0.0
      %2745 = vmatpush1.msra.mxu0 0.0
      %2746 = vmatprep.subr.mxu0 0.0
      %2747 = vmatpush1.msra.mxu0 0.0
      %2748 = vmatprep.subr.mxu0 0.0
      %2749 = vmatpush1.msra.mxu0 0.0
      %2750 = vmatprep.subr.mxu0 0.0
      %2751 = vmatpush1.msra.mxu0 0.0
      %2752 = vmatprep.subr.mxu0 0.0
      %2753 = vmatpush1.msra.mxu0 0.0
      %2754 = vmatprep.subr.mxu0 0.0
      %2755 = vmatpush1.msra.mxu0 0.0
      %2756 = vmatprep.subr.mxu0 0.0
      %2757 = vmatpush1.msra.mxu0 0.0
      %2758 = vmatprep.subr.mxu0 0.0
      %2759 = vmatpush1.msra.mxu0 0.0
      %2760 = vmatprep.subr.mxu0 0.0
      %2761 = vmatpush1.msra.mxu0 0.0
      %2762 = vmatprep.subr.mxu0 0.0
      %2763 = vmatpush1.msra.mxu0 0.0
      %2764 = vmatprep.subr.mxu0 0.0
      %2765 = vmatpush1.msra.mxu0 0.0
      %2766 = vmatprep.subr.mxu0 0.0
      %2767 = vmatpush1.msra.mxu0 0.0
      %2768 = vmatprep.subr.mxu0 0.0
      %2769 = vmatpush1.msra.mxu0 0.0
      %2770 = vmatprep.subr.mxu0 0.0
      %2771 = vmatpush1.msra.mxu0 0.0
      %2772 = vmatprep.subr.mxu0 0.0
      %2773 = vmatpush1.msra.mxu0 0.0
      %2774 = vmatprep.subr.mxu0 0.0
      %2775 = vmatpush1.msra.mxu0 0.0
      %2776 = vmatprep.subr.mxu0 0.0
      %2777 = vmatpush1.msra.mxu0 0.0
      %2778 = vmatprep.subr.mxu0 0.0
      %2779 = vmatpush1.msra.mxu0 0.0
      %2780 = vmatprep.mubr.f32.mxu0 0.0
      %v2781 = vand.u32 %v2395, 4294901760
      %2782 = vmatmul.mubr.f32.gmra.mrb[0].mxu0 %v2781
      %v2783 = vpop.f32.mrb[0].mxu0
      %v2784 = vadd.f32 %v2707, %v2783
      %v2785 = vpop.f32.mrb[0].mxu0
      %2786 = vdwg.mxu0
      %2787 = vmatprep.subr.mxu0 0.0
      %v2788 = vand.u32 %v2392, 4294901760
      %2789 = vmatpush1.msra.mxu0 %v2788
      %2790 = vmatprep.subr.mxu0 0.0
      %v2791 = vand.u32 %v2399, 4294901760
      %2792 = vmatpush1.msra.mxu0 %v2791
      %2793 = vmatprep.subr.mxu0 0.0
      %2794 = vmatpush1.msra.mxu0 0.0
      %2795 = vmatprep.subr.mxu0 0.0
      %2796 = vmatpush1.msra.mxu0 0.0
      %2797 = vmatprep.subr.mxu0 0.0
      %2798 = vmatpush1.msra.mxu0 0.0
      %2799 = vmatprep.subr.mxu0 0.0
      %2800 = vmatpush1.msra.mxu0 0.0
      %2801 = vmatprep.subr.mxu0 0.0
      %2802 = vmatpush1.msra.mxu0 0.0
      %2803 = vmatprep.subr.mxu0 0.0
      %2804 = vmatpush1.msra.mxu0 0.0
      %2805 = vmatprep.subr.mxu0 0.0
      %2806 = vmatpush1.msra.mxu0 0.0
      %2807 = vmatprep.subr.mxu0 0.0
      %2808 = vmatpush1.msra.mxu0 0.0
      %2809 = vmatprep.subr.mxu0 0.0
      %2810 = vmatpush1.msra.mxu0 0.0
      %2811 = vmatprep.subr.mxu0 0.0
      %2812 = vmatpush1.msra.mxu0 0.0
      %2813 = vmatprep.subr.mxu0 0.0
      %2814 = vmatpush1.msra.mxu0 0.0
      %2815 = vmatprep.subr.mxu0 0.0
      %2816 = vmatpush1.msra.mxu0 0.0
      %2817 = vmatprep.subr.mxu0 0.0
      %2818 = vmatpush1.msra.mxu0 0.0
      %2819 = vmatprep.subr.mxu0 0.0
      %2820 = vmatpush1.msra.mxu0 0.0
      %2821 = vmatprep.subr.mxu0 0.0
      %2822 = vmatpush1.msra.mxu0 0.0
      %2823 = vmatprep.subr.mxu0 0.0
      %2824 = vmatpush1.msra.mxu0 0.0
      %2825 = vmatprep.subr.mxu0 0.0
      %2826 = vmatpush1.msra.mxu0 0.0
      %2827 = vmatprep.subr.mxu0 0.0
      %2828 = vmatpush1.msra.mxu0 0.0
      %2829 = vmatprep.subr.mxu0 0.0
      %2830 = vmatpush1.msra.mxu0 0.0
      %2831 = vmatprep.subr.mxu0 0.0
      %2832 = vmatpush1.msra.mxu0 0.0
      %2833 = vmatprep.subr.mxu0 0.0
      %2834 = vmatpush1.msra.mxu0 0.0
      %2835 = vmatprep.subr.mxu0 0.0
      %2836 = vmatpush1.msra.mxu0 0.0
      %2837 = vmatprep.subr.mxu0 0.0
      %2838 = vmatpush1.msra.mxu0 0.0
      %2839 = vmatprep.subr.mxu0 0.0
      %2840 = vmatpush1.msra.mxu0 0.0
      %2841 = vmatprep.subr.mxu0 0.0
      %2842 = vmatpush1.msra.mxu0 0.0
      %2843 = vmatprep.subr.mxu0 0.0
      %2844 = vmatpush1.msra.mxu0 0.0
      %2845 = vmatprep.subr.mxu0 0.0
      %2846 = vmatpush1.msra.mxu0 0.0
      %2847 = vmatprep.subr.mxu0 0.0
      %2848 = vmatpush1.msra.mxu0 0.0
      %2849 = vmatprep.subr.mxu0 0.0
      %2850 = vmatpush1.msra.mxu0 0.0
      %2851 = vmatprep.subr.mxu0 0.0
      %2852 = vmatpush1.msra.mxu0 0.0
      %2853 = vmatprep.mubr.f32.mxu0 0.0
      %v2854 = vand.u32 %v2395, 4294901760
      %2855 = vmatmul.mubr.f32.gmra.mrb[0].mxu0 %v2854
      %v2856 = vpop.f32.mrb[0].mxu0
      %v2857 = vadd.f32 %v2784, %v2856
      %v2858 = vpop.f32.mrb[0].mxu0
      %2859 = vdwg.mxu0
      %2860 = vst.msk [vmem:[%s327] sm:$0xff] %vm363, %v2857
      %p2861 = scmp.lt.s32.totalorder %s20, 1
      %s2862 = scalar_select %p2861, %s20, 1
      %s2863 = smul.addr %s2862, 8
      %s2864 = scalar_lea.vmem %s9, %s2863
      // Predicated region
      $region57: #{pixel_pose_forward.1} parent=55 // pred_check
        %p2865 = pneg %p232
      $region58: #{pixel_pose_forward.1} parent=55 // pred_check_branch
        %2867 = sbr.rel (%p2865) target = $region60
      $region59: #{pixel_pose_forward.1} parent=55 // pred_region
        _
      $region60: #{pixel_pose_forward.1} parent=55 // pred_fallthru
        _
    $region56: #{pixel_pose_forward.1} parent=5 // pred_fallthru
      _
    %p2868 = scmp.le.s32.totalorder 2, %s15
    // Predicated region
    $region61: #{pixel_pose_forward.1} parent=5 // pred_check
      %p2869 = pneg %p2868
    $region62: #{pixel_pose_forward.1} parent=5 // pred_check_branch
      %2871 = sbr.rel (%p2869) target = $region64
    $region63: #{pixel_pose_forward.1} parent=5 // pred_region
      %s2872 = ssub.s32 %s15, 2
      // Predicated region
      $region65: #{pixel_pose_forward.1} parent=63 // pred_check
        %p2873 = pneg %p238
      $region66: #{pixel_pose_forward.1} parent=63 // pred_check_branch
        %2875 = sbr.rel (%p2873) target = $region68
      $region67: #{pixel_pose_forward.1} parent=63 // pred_region
        %p2876 = scmp.lt.s32.totalorder %s21, 1
        %s2877 = scalar_select %p2876, %s21, 1
        %s2878 = smul.addr %s2877, 8
        %s2879 = scalar_lea.vmem %s9, %s2878
      $region68: #{pixel_pose_forward.1} parent=63 // pred_fallthru
        _
    $region64: #{pixel_pose_forward.1} parent=5 // pred_fallthru
      _
  $region6: #{pixel_pose_forward.1} parent=0 // loop_footer
    %s19 = sadd.s32 1, %s15
  $region7: #{pixel_pose_forward.1} parent=0 // loop_footer_branch
    %14 = sbr.rel target = $region3
  $region8: #{pixel_pose_forward.1} parent=0 // loop_exit
    _

</llo_original>
